<compile_context>
chip_gen: v7x
topology: tpu7x:2x2x1
jax: 0.10.0
libtpu: 0.0.40
codegen_flags: <defaults>
</compile_context>

<pallas_src>
import functools

import jax
import jax.numpy as jnp
from jax.experimental import pallas as pl
from jax.experimental.pallas import tpu as pltpu


def _round_up(x, m):
    return (x + m - 1) // m * m


def _mlp_kernel(x_ref, w1t_ref, b1_ref, w2t_ref, b2_ref, w3t_ref, b3_ref, o_ref):
    """3 fused Linear+ReLU layers.  x block is (C_in, Tt) or (Bb, C_in, T)."""
    cdt = w1t_ref.dtype                      # MXU input dtype (bf16 default, f32 opt)

    def one(x):                              # (C_in, Tt) f32 -> (C_out, Tt) f32
        h = jnp.dot(w1t_ref[...], x.astype(cdt), preferred_element_type=jnp.float32)
        h = jnp.maximum(h + b1_ref[...], 0.0)                 # (120, Tt) f32
        h = jnp.dot(w2t_ref[...], h.astype(cdt), preferred_element_type=jnp.float32)
        h = jnp.maximum(h + b2_ref[...], 0.0)                 # (64, Tt)  f32
        h = jnp.dot(w3t_ref[...], h.astype(cdt), preferred_element_type=jnp.float32)
        h = jnp.maximum(h + b3_ref[...], 0.0)                 # (C_out, Tt) f32
        return h

    if len(x_ref.shape) == 2:                                 # lane-dense fast path
        o_ref[...] = one(x_ref[...]).astype(o_ref.dtype)
    else:                                                     # small-T batch group
        for i in range(x_ref.shape[0]):                       # static unroll (<= 8)
            o_ref[i] = one(x_ref[i]).astype(o_ref.dtype)


def _choose_t_tile(B, T, max_t_tile):
    """Lane-axis tile for the T >= 128 path (multiple of 128; 256 when possible)."""
    max_t_tile = max(256, _round_up(max_t_tile, 256))         # validate: 256-multiple
    if T <= max_t_tile:
        if B == 1 and T >= 512:
            # v7x shards "parallel" grid axes over 2 TensorCores: make sure a
            # single-batch input still produces >= 2 grid steps.
            return _round_up(pl.cdiv(T, 2), 128)
        return T                                              # single full-dim block
    return max_t_tile                                         # ragged last block masked


@functools.partial(jax.jit, static_argnames=("max_t_tile", "compute_dtype"))
def textnw_forward(x, params, *, max_t_tile=1024, compute_dtype=jnp.bfloat16):
    """x: (B, inp1, T) float32  ->  (B, fc_out3, T) float32.

    params: (w1t, b1, w2t, b2, w3t, b3); weights stored transposed
    (out_features, in_features), biases as (out_features, 1) columns.
    """
    w1t, b1, w2t, b2, w3t, b3 = params
    B, C_in, T = x.shape
    C_out = w3t.shape[0]

    # Zero-pad fc2's 60 outputs to a sublane multiple (64).  Weight-only pads;
    # the padded rows/cols are exact no-ops in the math.
    pad2 = (-w2t.shape[0]) % 8
    if pad2:
        w2t = jnp.pad(w2t, ((0, pad2), (0, 0)))
        b2 = jnp.pad(b2, ((0, pad2), (0, 0)))
        w3t = jnp.pad(w3t, ((0, 0), (0, pad2)))

    # Only the tiny weights are cast at the boundary; x stays f32 in HBM and is
    # cast to the compute dtype inside the kernel.  Biases stay f32.
    weights = (w1t.astype(compute_dtype), b1,
               w2t.astype(compute_dtype), b2,
               w3t.astype(compute_dtype), b3)

    if T >= 128:
        # Lane-dense path: one (batch, T-tile) slab per grid step.
        t_tile = _choose_t_tile(B, T, max_t_tile)
        grid = (B, pl.cdiv(T, t_tile))
        const = lambda b, t: (0, 0)
        x_spec = pl.BlockSpec((None, C_in, t_tile), lambda b, t: (b, 0, t))
        o_spec = pl.BlockSpec((None, C_out, t_tile), lambda b, t: (b, 0, t))
        dims = ("parallel", "parallel")
    else:
        # Small-T path (T < 128 lanes): group batch rows per grid step so the
        # weights stay resident and per-step overhead is amortized.
        # TODO(synk): lane occupancy is still T/128 here; fully lane-dense small-T
        # would need a (C, B*T) relayout, i.e. an extra HBM pass over x.
        bb = min(B, 8)
        while B % bb:                                         # bb divides B
            bb -= 1
        grid = (B // bb,)
        const = lambda i: (0, 0)
        x_spec = pl.BlockSpec((bb, C_in, T), lambda i: (i, 0, 0))
        o_spec = pl.BlockSpec((bb, C_out, T), lambda i: (i, 0, 0))
        dims = ("parallel",)

    # Weights/biases: whole array, constant block index -> fetched once.
    full = lambda a: pl.BlockSpec(a.shape, const)

    return pl.pallas_call(
        _mlp_kernel,
        out_shape=jax.ShapeDtypeStruct((B, C_out, T), jnp.float32),
        grid_spec=pltpu.PrefetchScalarGridSpec(
            num_scalar_prefetch=0,
            grid=grid,
            in_specs=[x_spec] + [full(a) for a in weights],
            out_specs=o_spec,
        ),
        compiler_params=pltpu.CompilerParams(dimension_semantics=dims),
    )(x, *weights)


def init_params(key, inp1=300, fc_out1=120, fc_out2=60, fc_out3=32):
    """Deterministic synthetic init.  Weights stored as (out, in) for W^T @ x."""
    ks = jax.random.split(key, 6)

    def linear(kw, kb, fan_in, fan_out):
        bound = 1.0 / jnp.sqrt(fan_in)
        wT = jax.random.uniform(kw, (fan_out, fan_in), jnp.float32, -bound, bound)
        b = jax.random.uniform(kb, (fan_out, 1), jnp.float32, -bound, bound)
        return wT, b

    w1t, b1 = linear(ks[0], ks[1], inp1, fc_out1)
    w2t, b2 = linear(ks[2], ks[3], fc_out1, fc_out2)
    w3t, b3 = linear(ks[4], ks[5], fc_out2, fc_out3)
    return (w1t, b1, w2t, b2, w3t, b3)


def _reference(x, params):
    w1t, b1, w2t, b2, w3t, b3 = params
    y = jnp.transpose(x, (0, 2, 1))                     # (B, T, C_in)
    y = jax.nn.relu(y @ w1t.T + b1[:, 0])
    y = jax.nn.relu(y @ w2t.T + b2[:, 0])
    y = jax.nn.relu(y @ w3t.T + b3[:, 0])
    return jnp.transpose(y, (0, 2, 1))                  # (B, C_out, T)


if __name__ == "__main__":
    key = jax.random.PRNGKey(0)
    kx, kp, kx2, kx3 = jax.random.split(key, 4)

    B, INP1, T = 2, 300, 8                              # x: (batch, 300 feats, seq=8)
    x = jax.random.normal(kx, (B, INP1, T), jnp.float32)
    params = init_params(kp, inp1=INP1)
    ref = _reference(x, params)

    # 1) small-T path (T < 128 lanes): batched-rows kernel.  bf16 default + f32 exact.
    out_bf = jax.block_until_ready(textnw_forward(x, params))
    assert out_bf.shape == (B, 32, T), out_bf.shape
    assert jnp.allclose(out_bf, ref, atol=1e-1, rtol=1e-1), "small-T bf16 mismatch"
    out_f32 = jax.block_until_ready(textnw_forward(x, params, compute_dtype=jnp.float32))
    assert jnp.allclose(out_f32, ref, atol=1e-4, rtol=1e-4), "small-T f32 mismatch"

    # 2) lane-dense path with a ragged tail tile (T=600, tile=512 -> 512 + masked 88).
    T2 = 600
    x2 = jax.random.normal(kx2, (B, INP1, T2), jnp.float32)
    ref2 = _reference(x2, params)
    out2 = jax.block_until_ready(
        textnw_forward(x2, params, max_t_tile=512, compute_dtype=jnp.float32))
    assert out2.shape == (B, 32, T2), out2.shape
    assert jnp.allclose(out2, ref2, atol=1e-4, rtol=1e-4), "tiled f32 mismatch"
    out2_bf = jax.block_until_ready(textnw_forward(x2, params, max_t_tile=512))
    assert jnp.allclose(out2_bf, ref2, atol=1e-1, rtol=1e-1), "tiled bf16 mismatch"

    # 3) B == 1: tile is split so both v7x TensorCores get a grid step.
    x3 = jax.random.normal(kx3, (1, INP1, 512), jnp.float32)
    out3 = jax.block_until_ready(textnw_forward(x3, params))
    assert jnp.allclose(out3, _reference(x3, params), atol=1e-1, rtol=1e-1), "B=1 mismatch"

    print("KERNEL_OK")
</pallas_src>

<mosaic_0001>
module attributes {stable_mosaic.version = 11 : i64} {
  func.func @_mlp_kernel(%arg0: i32, %arg1: memref<2x300x8xf32, #tpu.memory_space<vmem>>, %arg2: memref<120x300xbf16, #tpu.memory_space<vmem>>, %arg3: memref<120x1xf32, #tpu.memory_space<vmem>>, %arg4: memref<64x120xbf16, #tpu.memory_space<vmem>>, %arg5: memref<64x1xf32, #tpu.memory_space<vmem>>, %arg6: memref<32x64xbf16, #tpu.memory_space<vmem>>, %arg7: memref<32x1xf32, #tpu.memory_space<vmem>>, %arg8: memref<2x32x8xf32, #tpu.memory_space<vmem>>) attributes {dimension_semantics = [#tpu.dimension_semantics<parallel>], iteration_bounds = array<i64: 1>, scalar_prefetch = 0 : i64, scratch_operands = 0 : i64, tpu.core_type = #tpu.core_type<tc>, window_params = [{transform_indices = @transform_0, window_bounds = array<i64: 2, 300, 8>}, {pipeline_mode = #tpu.pipeline_mode<synchronous>, transform_indices = @transform_1, window_bounds = array<i64: 120, 300>}, {pipeline_mode = #tpu.pipeline_mode<synchronous>, transform_indices = @transform_2, window_bounds = array<i64: 120, 1>}, {pipeline_mode = #tpu.pipeline_mode<synchronous>, transform_indices = @transform_3, window_bounds = array<i64: 64, 120>}, {pipeline_mode = #tpu.pipeline_mode<synchronous>, transform_indices = @transform_4, window_bounds = array<i64: 64, 1>}, {pipeline_mode = #tpu.pipeline_mode<synchronous>, transform_indices = @transform_5, window_bounds = array<i64: 32, 64>}, {pipeline_mode = #tpu.pipeline_mode<synchronous>, transform_indices = @transform_6, window_bounds = array<i64: 32, 1>}, {transform_indices = @transform_7, window_bounds = array<i64: 2, 32, 8>}]} {
    %c0 = arith.constant 0 : index
    %c0_0 = arith.constant 0 : index
    %c0_1 = arith.constant 0 : index
    %0 = vector.load %arg1[%c0, %c0_0, %c0_1] : memref<2x300x8xf32, #tpu.memory_space<vmem>>, vector<1x300x8xf32>
    %1 = vector.shape_cast %0 : vector<1x300x8xf32> to vector<300x8xf32>
    %c0_2 = arith.constant 0 : index
    %c0_3 = arith.constant 0 : index
    %2 = vector.load %arg2[%c0_2, %c0_3] : memref<120x300xbf16, #tpu.memory_space<vmem>>, vector<120x300xbf16>
    %3 = arith.truncf %1 : vector<300x8xf32> to vector<300x8xbf16>
    %cst = arith.constant dense<0.000000e+00> : vector<120x8xf32>
    %4 = tpu.matmul %2, %3, %cst {dimension_numbers = #tpu.dot_dimension_numbers<[1], [0], [0], [1], [0, 0, 1, 1], [], []>} : vector<120x300xbf16>, vector<300x8xbf16>, vector<120x8xf32> -> vector<120x8xf32>
    %c0_4 = arith.constant 0 : index
    %c0_5 = arith.constant 0 : index
    %5 = vector.load %arg3[%c0_4, %c0_5] : memref<120x1xf32, #tpu.memory_space<vmem>>, vector<120x1xf32>
    %6 = vector.broadcast %5 : vector<120x1xf32> to vector<120x8xf32>
    %7 = arith.addf %4, %6 : vector<120x8xf32>
    %cst_6 = arith.constant 0.000000e+00 : f32
    %8 = vector.broadcast %cst_6 : f32 to vector<120x8xf32>
    %9 = arith.maximumf %7, %8 : vector<120x8xf32>
    %c0_7 = arith.constant 0 : index
    %c0_8 = arith.constant 0 : index
    %10 = vector.load %arg4[%c0_7, %c0_8] : memref<64x120xbf16, #tpu.memory_space<vmem>>, vector<64x120xbf16>
    %11 = arith.truncf %9 : vector<120x8xf32> to vector<120x8xbf16>
    %cst_9 = arith.constant dense<0.000000e+00> : vector<64x8xf32>
    %12 = tpu.matmul %10, %11, %cst_9 {dimension_numbers = #tpu.dot_dimension_numbers<[1], [0], [0], [1], [0, 0, 1, 1], [], []>} : vector<64x120xbf16>, vector<120x8xbf16>, vector<64x8xf32> -> vector<64x8xf32>
    %c0_10 = arith.constant 0 : index
    %c0_11 = arith.constant 0 : index
    %13 = vector.load %arg5[%c0_10, %c0_11] : memref<64x1xf32, #tpu.memory_space<vmem>>, vector<64x1xf32>
    %14 = vector.broadcast %13 : vector<64x1xf32> to vector<64x8xf32>
    %15 = arith.addf %12, %14 : vector<64x8xf32>
    %cst_12 = arith.constant 0.000000e+00 : f32
    %16 = vector.broadcast %cst_12 : f32 to vector<64x8xf32>
    %17 = arith.maximumf %15, %16 : vector<64x8xf32>
    %c0_13 = arith.constant 0 : index
    %c0_14 = arith.constant 0 : index
    %18 = vector.load %arg6[%c0_13, %c0_14] : memref<32x64xbf16, #tpu.memory_space<vmem>>, vector<32x64xbf16>
    %19 = arith.truncf %17 : vector<64x8xf32> to vector<64x8xbf16>
    %cst_15 = arith.constant dense<0.000000e+00> : vector<32x8xf32>
    %20 = tpu.matmul %18, %19, %cst_15 {dimension_numbers = #tpu.dot_dimension_numbers<[1], [0], [0], [1], [0, 0, 1, 1], [], []>} : vector<32x64xbf16>, vector<64x8xbf16>, vector<32x8xf32> -> vector<32x8xf32>
    %c0_16 = arith.constant 0 : index
    %c0_17 = arith.constant 0 : index
    %21 = vector.load %arg7[%c0_16, %c0_17] : memref<32x1xf32, #tpu.memory_space<vmem>>, vector<32x1xf32>
    %22 = vector.broadcast %21 : vector<32x1xf32> to vector<32x8xf32>
    %23 = arith.addf %20, %22 : vector<32x8xf32>
    %cst_18 = arith.constant 0.000000e+00 : f32
    %24 = vector.broadcast %cst_18 : f32 to vector<32x8xf32>
    %25 = arith.maximumf %23, %24 : vector<32x8xf32>
    %c0_19 = arith.constant 0 : index
    %c0_20 = arith.constant 0 : index
    %c0_21 = arith.constant 0 : index
    %26 = vector.load %arg8[%c0_19, %c0_20, %c0_21] : memref<2x32x8xf32, #tpu.memory_space<vmem>>, vector<1x32x8xf32>
    %27 = vector.shape_cast %26 : vector<1x32x8xf32> to vector<32x8xf32>
    %28 = vector.shape_cast %25 : vector<32x8xf32> to vector<1x32x8xf32>
    tpu.vector_store %arg8[%c0_19, %c0_20, %c0_21], %28 {strides = array<i32>} : memref<2x32x8xf32, #tpu.memory_space<vmem>>, vector<1x32x8xf32>,
    %c1 = arith.constant 1 : index
    %c0_22 = arith.constant 0 : index
    %c0_23 = arith.constant 0 : index
    %29 = vector.load %arg1[%c1, %c0_22, %c0_23] : memref<2x300x8xf32, #tpu.memory_space<vmem>>, vector<1x300x8xf32>
    %30 = vector.shape_cast %29 : vector<1x300x8xf32> to vector<300x8xf32>
    %c0_24 = arith.constant 0 : index
    %c0_25 = arith.constant 0 : index
    %31 = vector.load %arg2[%c0_24, %c0_25] : memref<120x300xbf16, #tpu.memory_space<vmem>>, vector<120x300xbf16>
    %32 = arith.truncf %30 : vector<300x8xf32> to vector<300x8xbf16>
    %cst_26 = arith.constant dense<0.000000e+00> : vector<120x8xf32>
    %33 = tpu.matmul %31, %32, %cst_26 {dimension_numbers = #tpu.dot_dimension_numbers<[1], [0], [0], [1], [0, 0, 1, 1], [], []>} : vector<120x300xbf16>, vector<300x8xbf16>, vector<120x8xf32> -> vector<120x8xf32>
    %c0_27 = arith.constant 0 : index
    %c0_28 = arith.constant 0 : index
    %34 = vector.load %arg3[%c0_27, %c0_28] : memref<120x1xf32, #tpu.memory_space<vmem>>, vector<120x1xf32>
    %35 = vector.broadcast %34 : vector<120x1xf32> to vector<120x8xf32>
    %36 = arith.addf %33, %35 : vector<120x8xf32>
    %cst_29 = arith.constant 0.000000e+00 : f32
    %37 = vector.broadcast %cst_29 : f32 to vector<120x8xf32>
    %38 = arith.maximumf %36, %37 : vector<120x8xf32>
    %c0_30 = arith.constant 0 : index
    %c0_31 = arith.constant 0 : index
    %39 = vector.load %arg4[%c0_30, %c0_31] : memref<64x120xbf16, #tpu.memory_space<vmem>>, vector<64x120xbf16>
    %40 = arith.truncf %38 : vector<120x8xf32> to vector<120x8xbf16>
    %cst_32 = arith.constant dense<0.000000e+00> : vector<64x8xf32>
    %41 = tpu.matmul %39, %40, %cst_32 {dimension_numbers = #tpu.dot_dimension_numbers<[1], [0], [0], [1], [0, 0, 1, 1], [], []>} : vector<64x120xbf16>, vector<120x8xbf16>, vector<64x8xf32> -> vector<64x8xf32>
    %c0_33 = arith.constant 0 : index
    %c0_34 = arith.constant 0 : index
    %42 = vector.load %arg5[%c0_33, %c0_34] : memref<64x1xf32, #tpu.memory_space<vmem>>, vector<64x1xf32>
    %43 = vector.broadcast %42 : vector<64x1xf32> to vector<64x8xf32>
    %44 = arith.addf %41, %43 : vector<64x8xf32>
    %cst_35 = arith.constant 0.000000e+00 : f32
    %45 = vector.broadcast %cst_35 : f32 to vector<64x8xf32>
    %46 = arith.maximumf %44, %45 : vector<64x8xf32>
    %c0_36 = arith.constant 0 : index
    %c0_37 = arith.constant 0 : index
    %47 = vector.load %arg6[%c0_36, %c0_37] : memref<32x64xbf16, #tpu.memory_space<vmem>>, vector<32x64xbf16>
    %48 = arith.truncf %46 : vector<64x8xf32> to vector<64x8xbf16>
    %cst_38 = arith.constant dense<0.000000e+00> : vector<32x8xf32>
    %49 = tpu.matmul %47, %48, %cst_38 {dimension_numbers = #tpu.dot_dimension_numbers<[1], [0], [0], [1], [0, 0, 1, 1], [], []>} : vector<32x64xbf16>, vector<64x8xbf16>, vector<32x8xf32> -> vector<32x8xf32>
    %c0_39 = arith.constant 0 : index
    %c0_40 = arith.constant 0 : index
    %50 = vector.load %arg7[%c0_39, %c0_40] : memref<32x1xf32, #tpu.memory_space<vmem>>, vector<32x1xf32>
    %51 = vector.broadcast %50 : vector<32x1xf32> to vector<32x8xf32>
    %52 = arith.addf %49, %51 : vector<32x8xf32>
    %cst_41 = arith.constant 0.000000e+00 : f32
    %53 = vector.broadcast %cst_41 : f32 to vector<32x8xf32>
    %54 = arith.maximumf %52, %53 : vector<32x8xf32>
    %c1_42 = arith.constant 1 : index
    %c0_43 = arith.constant 0 : index
    %c0_44 = arith.constant 0 : index
    %55 = vector.load %arg8[%c1_42, %c0_43, %c0_44] : memref<2x32x8xf32, #tpu.memory_space<vmem>>, vector<1x32x8xf32>
    %56 = vector.shape_cast %55 : vector<1x32x8xf32> to vector<32x8xf32>
    %57 = vector.shape_cast %54 : vector<32x8xf32> to vector<1x32x8xf32>
    tpu.vector_store %arg8[%c1_42, %c0_43, %c0_44], %57 {strides = array<i32>} : memref<2x32x8xf32, #tpu.memory_space<vmem>>, vector<1x32x8xf32>,
    return
  }
  func.func @transform_0(%arg0: i32) -> (i32, i32, i32) {
    %c0_i32 = arith.constant 0 : i32
    %c0_i32_0 = arith.constant 0 : i32
    %c0_i32_1 = arith.constant 0 : i32
    return %arg0, %c0_i32, %c0_i32_0 : i32, i32, i32
  }
  func.func @transform_1(%arg0: i32) -> (i32, i32) {
    %c0_i32 = arith.constant 0 : i32
    %c0_i32_0 = arith.constant 0 : i32
    %c0_i32_1 = arith.constant 0 : i32
    return %c0_i32, %c0_i32_0 : i32, i32
  }
  func.func @transform_2(%arg0: i32) -> (i32, i32) {
    %c0_i32 = arith.constant 0 : i32
    %c0_i32_0 = arith.constant 0 : i32
    %c0_i32_1 = arith.constant 0 : i32
    return %c0_i32, %c0_i32_0 : i32, i32
  }
  func.func @transform_3(%arg0: i32) -> (i32, i32) {
    %c0_i32 = arith.constant 0 : i32
    %c0_i32_0 = arith.constant 0 : i32
    %c0_i32_1 = arith.constant 0 : i32
    return %c0_i32, %c0_i32_0 : i32, i32
  }
  func.func @transform_4(%arg0: i32) -> (i32, i32) {
    %c0_i32 = arith.constant 0 : i32
    %c0_i32_0 = arith.constant 0 : i32
    %c0_i32_1 = arith.constant 0 : i32
    return %c0_i32, %c0_i32_0 : i32, i32
  }
  func.func @transform_5(%arg0: i32) -> (i32, i32) {
    %c0_i32 = arith.constant 0 : i32
    %c0_i32_0 = arith.constant 0 : i32
    %c0_i32_1 = arith.constant 0 : i32
    return %c0_i32, %c0_i32_0 : i32, i32
  }
  func.func @transform_6(%arg0: i32) -> (i32, i32) {
    %c0_i32 = arith.constant 0 : i32
    %c0_i32_0 = arith.constant 0 : i32
    %c0_i32_1 = arith.constant 0 : i32
    return %c0_i32, %c0_i32_0 : i32, i32
  }
  func.func @transform_7(%arg0: i32) -> (i32, i32, i32) {
    %c0_i32 = arith.constant 0 : i32
    %c0_i32_0 = arith.constant 0 : i32
    %c0_i32_1 = arith.constant 0 : i32
    return %arg0, %c0_i32, %c0_i32_0 : i32, i32, i32
  }
}

</mosaic_0001>

<llo_original>
// kernel: textnw_forward.1
$region0: #{textnw_forward.1}
  #allocation0 [shape = 'u32[]', space=smem, size = 0x4, offset = 0x4, fixed_abs, tag = 'smem constant byte address 0x4 - core index']
  #allocation1 [shape = 'u32[144,128]{1,0:T(1,128)}', space=vmem, size = 0x12000, scoped, tag = 'internal scratch']
  %s0 = inlined_call_operand.vmem [shape: f32[2,300,8], index: 0, kind: input, shape index: {}]
  %s1 = inlined_call_operand.vmem [shape: bf16[120,300], index: 1, kind: input, shape index: {}]
  %s2 = inlined_call_operand.vmem [shape: f32[120,1], index: 2, kind: input, shape index: {}]
  %s3 = inlined_call_operand.vmem [shape: bf16[64,120], index: 3, kind: input, shape index: {}]
  %s4 = inlined_call_operand.vmem [shape: f32[64,1], index: 4, kind: input, shape index: {}]
  %s5 = inlined_call_operand.vmem [shape: bf16[32,64], index: 5, kind: input, shape index: {}]
  %s6 = inlined_call_operand.vmem [shape: f32[32,1], index: 6, kind: input, shape index: {}]
  %s7 = inlined_call_operand.vmem [shape: f32[2,32,8], index: 7, kind: output, shape index: {}]
  %s8 = sld [smem:[#allocation0]]
  $region38: #{textnw_forward.1} parent=0
    _
  %s10 = ssub.s32 1, %s8
  %s11 = scalar_select 0, %s10, %s8
  // Predicated region
  $region2: #{textnw_forward.1} parent=0 // pred_check
    _
  $region3: #{textnw_forward.1} parent=0 // pred_check_branch
    %13 = sbr.rel (0) target = $region5
  $region4: #{textnw_forward.1} parent=0 // pred_region
    _
  $region5: #{textnw_forward.1} parent=0 // pred_fallthru
    _
  // Predicated region
  $region6: #{textnw_forward.1} parent=0 // pred_check
    _
  $region7: #{textnw_forward.1} parent=0 // pred_check_branch
    %15 = sbr.rel (0) target = $region9
  $region8: #{textnw_forward.1} parent=0 // pred_region
    _
  $region9: #{textnw_forward.1} parent=0 // pred_fallthru
    _
  // Predicated region
  $region10: #{textnw_forward.1} parent=0 // pred_check
    _
  $region11: #{textnw_forward.1} parent=0 // pred_check_branch
    %17 = sbr.rel (0) target = $region13
  $region12: #{textnw_forward.1} parent=0 // pred_region
    _
  $region13: #{textnw_forward.1} parent=0 // pred_fallthru
    _
  // Predicated region
  $region14: #{textnw_forward.1} parent=0 // pred_check
    _
  $region15: #{textnw_forward.1} parent=0 // pred_check_branch
    %19 = sbr.rel (0) target = $region17
  $region16: #{textnw_forward.1} parent=0 // pred_region
    _
  $region17: #{textnw_forward.1} parent=0 // pred_fallthru
    _
  // Predicated region
  $region18: #{textnw_forward.1} parent=0 // pred_check
    _
  $region19: #{textnw_forward.1} parent=0 // pred_check_branch
    %21 = sbr.rel (0) target = $region21
  $region20: #{textnw_forward.1} parent=0 // pred_region
    _
  $region21: #{textnw_forward.1} parent=0 // pred_fallthru
    _
  // Predicated region
  $region22: #{textnw_forward.1} parent=0 // pred_check
    _
  $region23: #{textnw_forward.1} parent=0 // pred_check_branch
    %23 = sbr.rel (0) target = $region25
  $region24: #{textnw_forward.1} parent=0 // pred_region
    _
  $region25: #{textnw_forward.1} parent=0 // pred_fallthru
    _
  // Predicated region
  $region26: #{textnw_forward.1} parent=0 // pred_check
    _
  $region27: #{textnw_forward.1} parent=0 // pred_check_branch
    %25 = sbr.rel (0) target = $region29
  $region28: #{textnw_forward.1} parent=0 // pred_region
    _
  $region29: #{textnw_forward.1} parent=0 // pred_fallthru
    _
  %v27 = vld [vmem:[%s0] sm:$0xff]
  %v28 = vld [vmem:[%s0 + $0x8] sm:$0xff]
  %v29 = vld [vmem:[%s0 + $0x10] sm:$0xff]
  %v30 = vld [vmem:[%s0 + $0x18] sm:$0xff]
  %v31 = vld [vmem:[%s0 + $0x20] sm:$0xff]
  %v32 = vld [vmem:[%s0 + $0x28] sm:$0xff]
  %v33 = vld [vmem:[%s0 + $0x30] sm:$0xff]
  %v34 = vld [vmem:[%s0 + $0x38] sm:$0xff]
  %v35 = vld [vmem:[%s0 + $0x40] sm:$0xff]
  %v36 = vld [vmem:[%s0 + $0x48] sm:$0xff]
  %v37 = vld [vmem:[%s0 + $0x50] sm:$0xff]
  %v38 = vld [vmem:[%s0 + $0x58] sm:$0xff]
  %v39 = vld [vmem:[%s0 + $0x60] sm:$0xff]
  %v40 = vld [vmem:[%s0 + $0x68] sm:$0xff]
  %v41 = vld [vmem:[%s0 + $0x70] sm:$0xff]
  %v42 = vld [vmem:[%s0 + $0x78] sm:$0xff]
  %v43 = vld [vmem:[%s0 + $0x80] sm:$0xff]
  %v44 = vld [vmem:[%s0 + $0x88] sm:$0xff]
  %v45 = vld [vmem:[%s0 + $0x90] sm:$0xff]
  %v46 = vld [vmem:[%s0 + $0x98] sm:$0xff]
  %v47 = vld [vmem:[%s0 + $0xa0] sm:$0xff]
  %v48 = vld [vmem:[%s0 + $0xa8] sm:$0xff]
  %v49 = vld [vmem:[%s0 + $0xb0] sm:$0xff]
  %v50 = vld [vmem:[%s0 + $0xb8] sm:$0xff]
  %v51 = vld [vmem:[%s0 + $0xc0] sm:$0xff]
  %v52 = vld [vmem:[%s0 + $0xc8] sm:$0xff]
  %v53 = vld [vmem:[%s0 + $0xd0] sm:$0xff]
  %v54 = vld [vmem:[%s0 + $0xd8] sm:$0xff]
  %v55 = vld [vmem:[%s0 + $0xe0] sm:$0xff]
  %v56 = vld [vmem:[%s0 + $0xe8] sm:$0xff]
  %v57 = vld [vmem:[%s0 + $0xf0] sm:$0xff]
  %v58 = vld [vmem:[%s0 + $0xf8] sm:$0xff]
  %v59 = vld [vmem:[%s0 + $0x100] sm:$0xff]
  %v60 = vld [vmem:[%s0 + $0x108] sm:$0xff]
  %v61 = vld [vmem:[%s0 + $0x110] sm:$0xff]
  %v62 = vld [vmem:[%s0 + $0x118] sm:$0xff]
  %v63 = vld [vmem:[%s0 + $0x120] sm:$0xff]
  %v64 = vld [vmem:[%s0 + $0x128] sm:$0xf]
  %v65 = vld [vmem:[%s1] sm:$0xff]
  %v66 = vld [vmem:[%s1 + $0x8] sm:$0xf]
  %v67 = vld [vmem:[%s1 + $0xc] sm:$0xff]
  %v68 = vld [vmem:[%s1 + $0x14] sm:$0xf]
  %v69 = vld [vmem:[%s1 + $0x18] sm:$0xff]
  %v70 = vld [vmem:[%s1 + $0x20] sm:$0xf]
  %v71 = vld [vmem:[%s1 + $0x24] sm:$0xff]
  %v72 = vld [vmem:[%s1 + $0x2c] sm:$0xf]
  %v73 = vld [vmem:[%s1 + $0x30] sm:$0xff]
  %v74 = vld [vmem:[%s1 + $0x38] sm:$0xf]
  %v75 = vld [vmem:[%s1 + $0x3c] sm:$0xff]
  %v76 = vld [vmem:[%s1 + $0x44] sm:$0xf]
  %v77 = vld [vmem:[%s1 + $0x48] sm:$0xff]
  %v78 = vld [vmem:[%s1 + $0x50] sm:$0xf]
  %v79 = vld [vmem:[%s1 + $0x54] sm:$0xff]
  %v80 = vld [vmem:[%s1 + $0x5c] sm:$0xf]
  %v81 = vld [vmem:[%s1 + $0x60] sm:$0xff]
  %v82 = vld [vmem:[%s1 + $0x68] sm:$0xf]
  %v83 = vld [vmem:[%s1 + $0x6c] sm:$0xff]
  %v84 = vld [vmem:[%s1 + $0x74] sm:$0xf]
  %v85 = vld [vmem:[%s1 + $0x78] sm:$0xff]
  %v86 = vld [vmem:[%s1 + $0x80] sm:$0xf]
  %v87 = vld [vmem:[%s1 + $0x84] sm:$0xff]
  %v88 = vld [vmem:[%s1 + $0x8c] sm:$0xf]
  %v89 = vld [vmem:[%s1 + $0x90] sm:$0xff]
  %v90 = vld [vmem:[%s1 + $0x98] sm:$0xf]
  %v91 = vld [vmem:[%s1 + $0x9c] sm:$0xff]
  %v92 = vld [vmem:[%s1 + $0xa4] sm:$0xf]
  %v93 = vld [vmem:[%s1 + $0xa8] sm:$0xff]
  %v94 = vld [vmem:[%s1 + $0xb0] sm:$0xf]
  %v95 = vpack.c.bf16 %v28, %v27
  %v96 = vpack.c.bf16 %v30, %v29
  %v97 = vpack.c.bf16 %v32, %v31
  %v98 = vpack.c.bf16 %v34, %v33
  %v99 = vpack.c.bf16 %v36, %v35
  %v100 = vpack.c.bf16 %v38, %v37
  %v101 = vpack.c.bf16 %v40, %v39
  %v102 = vpack.c.bf16 %v42, %v41
  %v103 = vpack.c.bf16 %v44, %v43
  %v104 = vpack.c.bf16 %v46, %v45
  %v105 = vpack.c.bf16 %v48, %v47
  %v106 = vpack.c.bf16 %v50, %v49
  %v107 = vpack.c.bf16 %v52, %v51
  %v108 = vpack.c.bf16 %v54, %v53
  %v109 = vpack.c.bf16 %v56, %v55
  %v110 = vpack.c.bf16 %v58, %v57
  %v111 = vpack.c.bf16 %v60, %v59
  %v112 = vpack.c.bf16 %v62, %v61
  %v113 = vpack.c.bf16 %v64, %v63
  %v114 = vld [vmem:[%s2] sm:$0xff]
  %v115 = vld [vmem:[%s2 + $0x8] sm:$0xff]
  %v116 = vld [vmem:[%s2 + $0x10] sm:$0xff]
  %v117 = vld [vmem:[%s2 + $0x18] sm:$0xff]
  %v118 = vld [vmem:[%s2 + $0x20] sm:$0xff]
  %v119 = vld [vmem:[%s2 + $0x28] sm:$0xff]
  %v120 = vld [vmem:[%s2 + $0x30] sm:$0xff]
  %v121 = vld [vmem:[%s2 + $0x38] sm:$0xff]
  %v122 = vld [vmem:[%s2 + $0x40] sm:$0xff]
  %v123 = vld [vmem:[%s2 + $0x48] sm:$0xff]
  %v124 = vld [vmem:[%s2 + $0x50] sm:$0xff]
  %v125 = vld [vmem:[%s2 + $0x58] sm:$0xff]
  %v126 = vld [vmem:[%s2 + $0x60] sm:$0xff]
  %v127 = vld [vmem:[%s2 + $0x68] sm:$0xff]
  %v128 = vld [vmem:[%s2 + $0x70] sm:$0xff]
  %130 = vset.pattern.permute.xlu0 0
  %131 = vperm.xlu0 %130, %v114
  %v132 = vpop.permute.xlu0 %131
  %135 = vset.pattern.permute.xlu0 0
  %136 = vperm.xlu0 %135, %v115
  %v137 = vpop.permute.xlu0 %136
  %140 = vset.pattern.permute.xlu0 0
  %141 = vperm.xlu0 %140, %v116
  %v142 = vpop.permute.xlu0 %141
  %145 = vset.pattern.permute.xlu0 0
  %146 = vperm.xlu0 %145, %v117
  %v147 = vpop.permute.xlu0 %146
  %150 = vset.pattern.permute.xlu0 0
  %151 = vperm.xlu0 %150, %v118
  %v152 = vpop.permute.xlu0 %151
  %155 = vset.pattern.permute.xlu0 0
  %156 = vperm.xlu0 %155, %v119
  %v157 = vpop.permute.xlu0 %156
  %160 = vset.pattern.permute.xlu0 0
  %161 = vperm.xlu0 %160, %v120
  %v162 = vpop.permute.xlu0 %161
  %165 = vset.pattern.permute.xlu0 0
  %166 = vperm.xlu0 %165, %v121
  %v167 = vpop.permute.xlu0 %166
  %170 = vset.pattern.permute.xlu0 0
  %171 = vperm.xlu0 %170, %v122
  %v172 = vpop.permute.xlu0 %171
  %175 = vset.pattern.permute.xlu0 0
  %176 = vperm.xlu0 %175, %v123
  %v177 = vpop.permute.xlu0 %176
  %180 = vset.pattern.permute.xlu0 0
  %181 = vperm.xlu0 %180, %v124
  %v182 = vpop.permute.xlu0 %181
  %185 = vset.pattern.permute.xlu0 0
  %186 = vperm.xlu0 %185, %v125
  %v187 = vpop.permute.xlu0 %186
  %190 = vset.pattern.permute.xlu0 0
  %191 = vperm.xlu0 %190, %v126
  %v192 = vpop.permute.xlu0 %191
  %195 = vset.pattern.permute.xlu0 0
  %196 = vperm.xlu0 %195, %v127
  %v197 = vpop.permute.xlu0 %196
  %200 = vset.pattern.permute.xlu0 0
  %201 = vperm.xlu0 %200, %v128
  %v202 = vpop.permute.xlu0 %201
  %v234 = vunpack.c.l.b16 %v65
  %v235 = vunpack.c.h.b16 %v65
  %v236 = vunpack.c.l.b16 %v66
  %v237 = vunpack.c.l.b16 %v67
  %v238 = vunpack.c.h.b16 %v67
  %v239 = vunpack.c.l.b16 %v68
  %v240 = vunpack.c.l.b16 %v69
  %v241 = vunpack.c.h.b16 %v69
  %v242 = vunpack.c.l.b16 %v70
  %v243 = vunpack.c.l.b16 %v71
  %v244 = vunpack.c.h.b16 %v71
  %v245 = vunpack.c.l.b16 %v72
  %v246 = vunpack.c.l.b16 %v73
  %v247 = vunpack.c.h.b16 %v73
  %v248 = vunpack.c.l.b16 %v74
  %v249 = vunpack.c.l.b16 %v75
  %v250 = vunpack.c.h.b16 %v75
  %v251 = vunpack.c.l.b16 %v76
  %v252 = vunpack.c.l.b16 %v77
  %v253 = vunpack.c.h.b16 %v77
  %v254 = vunpack.c.l.b16 %v78
  %v255 = vunpack.c.l.b16 %v79
  %v256 = vunpack.c.h.b16 %v79
  %v257 = vunpack.c.l.b16 %v80
  %v258 = vunpack.c.l.b16 %v81
  %v259 = vunpack.c.h.b16 %v81
  %v260 = vunpack.c.l.b16 %v82
  %v261 = vunpack.c.l.b16 %v83
  %v262 = vunpack.c.h.b16 %v83
  %v263 = vunpack.c.l.b16 %v84
  %v264 = vunpack.c.l.b16 %v85
  %v265 = vunpack.c.h.b16 %v85
  %v266 = vunpack.c.l.b16 %v86
  %v267 = vunpack.c.l.b16 %v87
  %v268 = vunpack.c.h.b16 %v87
  %v269 = vunpack.c.l.b16 %v88
  %v270 = vunpack.c.l.b16 %v89
  %v271 = vunpack.c.h.b16 %v89
  %v272 = vunpack.c.l.b16 %v90
  %v273 = vunpack.c.l.b16 %v91
  %v274 = vunpack.c.h.b16 %v91
  %v275 = vunpack.c.l.b16 %v92
  %v276 = vunpack.c.l.b16 %v93
  %v277 = vunpack.c.h.b16 %v93
  %v278 = vunpack.c.l.b16 %v94
  %v279 = vpack.c.b16 %v237, %v234
  %v280 = vpack.c.b16 %v238, %v235
  %v281 = vpack.c.b16 %v239, %v236
  %v282 = vpack.c.b16 %v243, %v240
  %v283 = vpack.c.b16 %v244, %v241
  %v284 = vpack.c.b16 %v245, %v242
  %v285 = vpack.c.b16 %v249, %v246
  %v286 = vpack.c.b16 %v250, %v247
  %v287 = vpack.c.b16 %v251, %v248
  %v288 = vpack.c.b16 %v255, %v252
  %v289 = vpack.c.b16 %v256, %v253
  %v290 = vpack.c.b16 %v257, %v254
  %v291 = vpack.c.b16 %v261, %v258
  %v292 = vpack.c.b16 %v262, %v259
  %v293 = vpack.c.b16 %v263, %v260
  %v294 = vpack.c.b16 %v267, %v264
  %v295 = vpack.c.b16 %v268, %v265
  %v296 = vpack.c.b16 %v269, %v266
  %v297 = vpack.c.b16 %v273, %v270
  %v298 = vpack.c.b16 %v274, %v271
  %v299 = vpack.c.b16 %v275, %v272
  %v300 = vpack.c.b16 %v276, %v276
  %v301 = vpack.c.b16 %v277, %v277
  %v302 = vpack.c.b16 %v278, %v278
  %vm319 = vcmask 359424
  %v321 = vsel %vm319, %v281, 0
  %v324 = vsel %vm319, %v284, 0
  %v327 = vsel %vm319, %v287, 0
  %v330 = vsel %vm319, %v290, 0
  %v333 = vsel %vm319, %v293, 0
  %v336 = vsel %vm319, %v296, 0
  %v339 = vsel %vm319, %v299, 0
  %v342 = vsel %vm319, %v302, 0
  %vm344 = vcmask 1045504
  %v346 = vsel %vm344, %v113, 0
  %348 = vmatprep.subr.bf16.mxu0 0
  %349 = vmatpush1.bf16.msra.mxu0 %v95
  %350 = vmatprep.subr.bf16.mxu0 0
  %351 = vmatpush1.bf16.msra.mxu0 %v96
  %352 = vmatprep.subr.bf16.mxu0 0
  %353 = vmatpush1.bf16.msra.mxu0 %v97
  %354 = vmatprep.subr.bf16.mxu0 0
  %355 = vmatpush1.bf16.msra.mxu0 %v98
  %356 = vmatprep.subr.bf16.mxu0 0
  %357 = vmatpush1.bf16.msra.mxu0 %v99
  %358 = vmatprep.subr.bf16.mxu0 0
  %359 = vmatpush1.bf16.msra.mxu0 %v100
  %360 = vmatprep.subr.bf16.mxu0 0
  %361 = vmatpush1.bf16.msra.mxu0 %v101
  %362 = vmatprep.subr.bf16.mxu0 0
  %363 = vmatpush1.bf16.msra.mxu0 %v102
  %364 = vmatprep.subr.bf16.mxu0 0
  %365 = vmatpush1.bf16.msra.mxu0 %v103
  %366 = vmatprep.subr.bf16.mxu0 0
  %367 = vmatpush1.bf16.msra.mxu0 %v104
  %368 = vmatprep.subr.bf16.mxu0 0
  %369 = vmatpush1.bf16.msra.mxu0 %v105
  %370 = vmatprep.subr.bf16.mxu0 0
  %371 = vmatpush1.bf16.msra.mxu0 %v106
  %372 = vmatprep.subr.bf16.mxu0 0
  %373 = vmatpush1.bf16.msra.mxu0 %v107
  %374 = vmatprep.subr.bf16.mxu0 0
  %375 = vmatpush1.bf16.msra.mxu0 %v108
  %376 = vmatprep.subr.bf16.mxu0 0
  %377 = vmatpush1.bf16.msra.mxu0 %v109
  %378 = vmatprep.subr.bf16.mxu0 0
  %379 = vmatpush1.bf16.msra.mxu0 %v110
  %380 = vmatprep.mubr.bf16.mxu0 %v280
  %381 = vmatmul.mubr.bf16.gmra.mrb[0].mxu0 %v279
  %v382 = vpop.f32.mrb[0].mxu0
  %v383 = vadd.f32 %v132, %v382
  %v384 = vpop.f32.mrb[0].mxu0
  %v385 = vpop.f32.mrb[0].mxu0
  %v386 = vadd.f32 %v137, %v385
  %v387 = vpop.f32.mrb[0].mxu0
  %388 = vmatprep.mubr.bf16.mxu0 %v283
  %389 = vmatmul.mubr.bf16.gmra.mrb[0].mxu0 %v282
  %v390 = vpop.f32.mrb[0].mxu0
  %v391 = vadd.f32 %v142, %v390
  %v392 = vpop.f32.mrb[0].mxu0
  %v393 = vpop.f32.mrb[0].mxu0
  %v394 = vadd.f32 %v147, %v393
  %v395 = vpop.f32.mrb[0].mxu0
  %396 = vmatprep.mubr.bf16.mxu0 %v286
  %397 = vmatmul.mubr.bf16.gmra.mrb[0].mxu0 %v285
  %v398 = vpop.f32.mrb[0].mxu0
  %v399 = vadd.f32 %v152, %v398
  %v400 = vpop.f32.mrb[0].mxu0
  %v401 = vpop.f32.mrb[0].mxu0
  %v402 = vadd.f32 %v157, %v401
  %v403 = vpop.f32.mrb[0].mxu0
  %404 = vmatprep.mubr.bf16.mxu0 %v289
  %405 = vmatmul.mubr.bf16.gmra.mrb[0].mxu0 %v288
  %v406 = vpop.f32.mrb[0].mxu0
  %v407 = vadd.f32 %v162, %v406
  %v408 = vpop.f32.mrb[0].mxu0
  %v409 = vpop.f32.mrb[0].mxu0
  %v410 = vadd.f32 %v167, %v409
  %v411 = vpop.f32.mrb[0].mxu0
  %412 = vmatprep.mubr.bf16.mxu0 %v292
  %413 = vmatmul.mubr.bf16.gmra.mrb[0].mxu0 %v291
  %v414 = vpop.f32.mrb[0].mxu0
  %v415 = vadd.f32 %v172, %v414
  %v416 = vpop.f32.mrb[0].mxu0
  %v417 = vpop.f32.mrb[0].mxu0
  %v418 = vadd.f32 %v177, %v417
  %v419 = vpop.f32.mrb[0].mxu0
  %420 = vmatprep.mubr.bf16.mxu0 %v295
  %421 = vmatmul.mubr.bf16.gmra.mrb[0].mxu0 %v294
  %v422 = vpop.f32.mrb[0].mxu0
  %v423 = vadd.f32 %v182, %v422
  %v424 = vpop.f32.mrb[0].mxu0
  %v425 = vpop.f32.mrb[0].mxu0
  %v426 = vadd.f32 %v187, %v425
  %v427 = vpop.f32.mrb[0].mxu0
  %428 = vmatprep.mubr.bf16.mxu0 %v298
  %429 = vmatmul.mubr.bf16.gmra.mrb[0].mxu0 %v297
  %v430 = vpop.f32.mrb[0].mxu0
  %v431 = vadd.f32 %v192, %v430
  %v432 = vpop.f32.mrb[0].mxu0
  %v433 = vpop.f32.mrb[0].mxu0
  %v434 = vadd.f32 %v197, %v433
  %v435 = vpop.f32.mrb[0].mxu0
  %436 = vmatprep.mubr.bf16.mxu0 %v301
  %437 = vmatmul.mubr.bf16.gmra.mrb[0].mxu0 %v300
  %v438 = vpop.f32.mrb[0].mxu0
  %v439 = vadd.f32 %v202, %v438
  %v440 = vpop.f32.mrb[0].mxu0
  %v441 = vpop.f32.mrb[0].mxu0
  %v442 = vpop.f32.mrb[0].mxu0
  %443 = vdwg.mxu0
  %444 = vmatprep.subr.bf16.mxu0 0
  %445 = vmatpush1.bf16.msra.mxu0 %v111
  %446 = vmatprep.subr.bf16.mxu0 0
  %447 = vmatpush1.bf16.msra.mxu0 %v112
  %448 = vmatprep.subr.bf16.mxu0 0
  %449 = vmatpush1.bf16.msra.mxu0 %v346
  %450 = vmatprep.subr.bf16.mxu0 0
  %451 = vmatpush1.bf16.msra.mxu0 0
  %452 = vmatprep.subr.bf16.mxu0 0
  %453 = vmatpush1.bf16.msra.mxu0 0
  %454 = vmatprep.subr.bf16.mxu0 0
  %455 = vmatpush1.bf16.msra.mxu0 0
  %456 = vmatprep.subr.bf16.mxu0 0
  %457 = vmatpush1.bf16.msra.mxu0 0
  %458 = vmatprep.subr.bf16.mxu0 0
  %459 = vmatpush1.bf16.msra.mxu0 0
  %460 = vmatprep.subr.bf16.mxu0 0
  %461 = vmatpush1.bf16.msra.mxu0 0
  %462 = vmatprep.subr.bf16.mxu0 0
  %463 = vmatpush1.bf16.msra.mxu0 0
  %464 = vmatprep.subr.bf16.mxu0 0
  %465 = vmatpush1.bf16.msra.mxu0 0
  %466 = vmatprep.subr.bf16.mxu0 0
  %467 = vmatpush1.bf16.msra.mxu0 0
  %468 = vmatprep.subr.bf16.mxu0 0
  %469 = vmatpush1.bf16.msra.mxu0 0
  %470 = vmatprep.subr.bf16.mxu0 0
  %471 = vmatpush1.bf16.msra.mxu0 0
  %472 = vmatprep.subr.bf16.mxu0 0
  %473 = vmatpush1.bf16.msra.mxu0 0
  %474 = vmatprep.subr.bf16.mxu0 0
  %475 = vmatpush1.bf16.msra.mxu0 0
  %476 = vmatprep.mubr.bf16.mxu0 0
  %477 = vmatmul.mubr.bf16.gmra.mrb[0].mxu0 %v321
  %v478 = vpop.f32.mrb[0].mxu0
  %v479 = vadd.f32 %v383, %v478
  %v480 = vpop.f32.mrb[0].mxu0
  %v481 = vpop.f32.mrb[0].mxu0
  %v482 = vadd.f32 %v386, %v481
  %v483 = vpop.f32.mrb[0].mxu0
  %484 = vmatprep.mubr.bf16.mxu0 0
  %485 = vmatmul.mubr.bf16.gmra.mrb[0].mxu0 %v324
  %v486 = vpop.f32.mrb[0].mxu0
  %v487 = vadd.f32 %v391, %v486
  %v488 = vpop.f32.mrb[0].mxu0
  %v489 = vpop.f32.mrb[0].mxu0
  %v490 = vadd.f32 %v394, %v489
  %v491 = vpop.f32.mrb[0].mxu0
  %492 = vmatprep.mubr.bf16.mxu0 0
  %493 = vmatmul.mubr.bf16.gmra.mrb[0].mxu0 %v327
  %v494 = vpop.f32.mrb[0].mxu0
  %v495 = vadd.f32 %v399, %v494
  %v496 = vpop.f32.mrb[0].mxu0
  %v497 = vpop.f32.mrb[0].mxu0
  %v498 = vadd.f32 %v402, %v497
  %v499 = vpop.f32.mrb[0].mxu0
  %500 = vmatprep.mubr.bf16.mxu0 0
  %501 = vmatmul.mubr.bf16.gmra.mrb[0].mxu0 %v330
  %v502 = vpop.f32.mrb[0].mxu0
  %v503 = vadd.f32 %v407, %v502
  %v504 = vpop.f32.mrb[0].mxu0
  %v505 = vpop.f32.mrb[0].mxu0
  %v506 = vadd.f32 %v410, %v505
  %v507 = vpop.f32.mrb[0].mxu0
  %508 = vmatprep.mubr.bf16.mxu0 0
  %509 = vmatmul.mubr.bf16.gmra.mrb[0].mxu0 %v333
  %v510 = vpop.f32.mrb[0].mxu0
  %v511 = vadd.f32 %v415, %v510
  %v512 = vpop.f32.mrb[0].mxu0
  %v513 = vpop.f32.mrb[0].mxu0
  %v514 = vadd.f32 %v418, %v513
  %v515 = vpop.f32.mrb[0].mxu0
  %516 = vmatprep.mubr.bf16.mxu0 0
  %517 = vmatmul.mubr.bf16.gmra.mrb[0].mxu0 %v336
  %v518 = vpop.f32.mrb[0].mxu0
  %v519 = vadd.f32 %v423, %v518
  %v520 = vpop.f32.mrb[0].mxu0
  %v521 = vpop.f32.mrb[0].mxu0
  %v522 = vadd.f32 %v426, %v521
  %v523 = vpop.f32.mrb[0].mxu0
  %524 = vmatprep.mubr.bf16.mxu0 0
  %525 = vmatmul.mubr.bf16.gmra.mrb[0].mxu0 %v339
  %v526 = vpop.f32.mrb[0].mxu0
  %v527 = vadd.f32 %v431, %v526
  %v528 = vpop.f32.mrb[0].mxu0
  %v529 = vpop.f32.mrb[0].mxu0
  %v530 = vadd.f32 %v434, %v529
  %v531 = vpop.f32.mrb[0].mxu0
  %532 = vmatprep.mubr.bf16.mxu0 0
  %533 = vmatmul.mubr.bf16.gmra.mrb[0].mxu0 %v342
  %v534 = vpop.f32.mrb[0].mxu0
  %v535 = vadd.f32 %v439, %v534
  %v536 = vpop.f32.mrb[0].mxu0
  %v537 = vpop.f32.mrb[0].mxu0
  %v538 = vpop.f32.mrb[0].mxu0
  %539 = vdwg.mxu0
  %v540 = vmax.f32 %v479, 0.0
  %v541 = vmax.f32 %v482, 0.0
  %v542 = vmax.f32 %v487, 0.0
  %v543 = vmax.f32 %v490, 0.0
  %v544 = vmax.f32 %v495, 0.0
  %v545 = vmax.f32 %v498, 0.0
  %v546 = vmax.f32 %v503, 0.0
  %v547 = vmax.f32 %v506, 0.0
  %v548 = vmax.f32 %v511, 0.0
  %v549 = vmax.f32 %v514, 0.0
  %v550 = vmax.f32 %v519, 0.0
  %v551 = vmax.f32 %v522, 0.0
  %v552 = vmax.f32 %v527, 0.0
  %v553 = vmax.f32 %v530, 0.0
  %v554 = vmax.f32 %v535, 0.0
  %v555 = vld [vmem:[%s3] sm:$0xf]
  %v556 = vld [vmem:[%s3 + $0x4] sm:$0xf]
  %v557 = vld [vmem:[%s3 + $0x8] sm:$0xf]
  %v558 = vld [vmem:[%s3 + $0xc] sm:$0xf]
  %v559 = vld [vmem:[%s3 + $0x10] sm:$0xf]
  %v560 = vld [vmem:[%s3 + $0x14] sm:$0xf]
  %v561 = vld [vmem:[%s3 + $0x18] sm:$0xf]
  %v562 = vld [vmem:[%s3 + $0x1c] sm:$0xf]
  %v563 = vpack.c.bf16 %v541, %v540
  %v564 = vpack.c.bf16 %v543, %v542
  %v565 = vpack.c.bf16 %v545, %v544
  %v566 = vpack.c.bf16 %v547, %v546
  %v567 = vpack.c.bf16 %v549, %v548
  %v568 = vpack.c.bf16 %v551, %v550
  %v569 = vpack.c.bf16 %v553, %v552
  %v570 = vpack.c.bf16 %v554, %v554
  %v571 = vld [vmem:[%s4] sm:$0xff]
  %v572 = vld [vmem:[%s4 + $0x8] sm:$0xff]
  %v573 = vld [vmem:[%s4 + $0x10] sm:$0xff]
  %v574 = vld [vmem:[%s4 + $0x18] sm:$0xff]
  %v575 = vld [vmem:[%s4 + $0x20] sm:$0xff]
  %v576 = vld [vmem:[%s4 + $0x28] sm:$0xff]
  %v577 = vld [vmem:[%s4 + $0x30] sm:$0xff]
  %v578 = vld [vmem:[%s4 + $0x38] sm:$0xff]
  %580 = vset.pattern.permute.xlu0 0
  %581 = vperm.xlu0 %580, %v571
  %v582 = vpop.permute.xlu0 %581
  %585 = vset.pattern.permute.xlu0 0
  %586 = vperm.xlu0 %585, %v572
  %v587 = vpop.permute.xlu0 %586
  %590 = vset.pattern.permute.xlu0 0
  %591 = vperm.xlu0 %590, %v573
  %v592 = vpop.permute.xlu0 %591
  %595 = vset.pattern.permute.xlu0 0
  %596 = vperm.xlu0 %595, %v574
  %v597 = vpop.permute.xlu0 %596
  %600 = vset.pattern.permute.xlu0 0
  %601 = vperm.xlu0 %600, %v575
  %v602 = vpop.permute.xlu0 %601
  %605 = vset.pattern.permute.xlu0 0
  %606 = vperm.xlu0 %605, %v576
  %v607 = vpop.permute.xlu0 %606
  %610 = vset.pattern.permute.xlu0 0
  %611 = vperm.xlu0 %610, %v577
  %v612 = vpop.permute.xlu0 %611
  %615 = vset.pattern.permute.xlu0 0
  %616 = vperm.xlu0 %615, %v578
  %v617 = vpop.permute.xlu0 %616
  %v627 = vunpack.c.l.b16 %v555
  %v628 = vunpack.c.l.b16 %v556
  %v629 = vunpack.c.l.b16 %v557
  %v630 = vunpack.c.l.b16 %v558
  %v631 = vunpack.c.l.b16 %v559
  %v632 = vunpack.c.l.b16 %v560
  %v633 = vunpack.c.l.b16 %v561
  %v634 = vunpack.c.l.b16 %v562
  %v635 = vpack.c.b16 %v628, %v627
  %v636 = vpack.c.b16 %v630, %v629
  %v637 = vpack.c.b16 %v632, %v631
  %v638 = vpack.c.b16 %v634, %v633
  %vm639 = vcmask 982016
  %v641 = vsel %vm639, %v635, 0
  %v644 = vsel %vm639, %v636, 0
  %v647 = vsel %vm639, %v637, 0
  %v650 = vsel %vm639, %v638, 0
  %vm652 = vcmask 1043456
  %v654 = vsel %vm652, %v570, 0
  %656 = vmatprep.subr.bf16.mxu0 0
  %657 = vmatpush1.bf16.msra.mxu0 %v563
  %658 = vmatprep.subr.bf16.mxu0 0
  %659 = vmatpush1.bf16.msra.mxu0 %v564
  %660 = vmatprep.subr.bf16.mxu0 0
  %661 = vmatpush1.bf16.msra.mxu0 %v565
  %662 = vmatprep.subr.bf16.mxu0 0
  %663 = vmatpush1.bf16.msra.mxu0 %v566
  %664 = vmatprep.subr.bf16.mxu0 0
  %665 = vmatpush1.bf16.msra.mxu0 %v567
  %666 = vmatprep.subr.bf16.mxu0 0
  %667 = vmatpush1.bf16.msra.mxu0 %v568
  %668 = vmatprep.subr.bf16.mxu0 0
  %669 = vmatpush1.bf16.msra.mxu0 %v569
  %670 = vmatprep.subr.bf16.mxu0 0
  %671 = vmatpush1.bf16.msra.mxu0 %v654
  %672 = vmatprep.subr.bf16.mxu0 0
  %673 = vmatpush1.bf16.msra.mxu0 0
  %674 = vmatprep.subr.bf16.mxu0 0
  %675 = vmatpush1.bf16.msra.mxu0 0
  %676 = vmatprep.subr.bf16.mxu0 0
  %677 = vmatpush1.bf16.msra.mxu0 0
  %678 = vmatprep.subr.bf16.mxu0 0
  %679 = vmatpush1.bf16.msra.mxu0 0
  %680 = vmatprep.subr.bf16.mxu0 0
  %681 = vmatpush1.bf16.msra.mxu0 0
  %682 = vmatprep.subr.bf16.mxu0 0
  %683 = vmatpush1.bf16.msra.mxu0 0
  %684 = vmatprep.subr.bf16.mxu0 0
  %685 = vmatpush1.bf16.msra.mxu0 0
  %686 = vmatprep.subr.bf16.mxu0 0
  %687 = vmatpush1.bf16.msra.mxu0 0
  %688 = vmatprep.mubr.bf16.mxu0 0
  %689 = vmatmul.mubr.bf16.gmra.mrb[0].mxu0 %v641
  %v690 = vpop.f32.mrb[0].mxu0
  %v691 = vadd.f32 %v582, %v690
  %v692 = vpop.f32.mrb[0].mxu0
  %v693 = vpop.f32.mrb[0].mxu0
  %v694 = vadd.f32 %v587, %v693
  %v695 = vpop.f32.mrb[0].mxu0
  %696 = vmatprep.mubr.bf16.mxu0 0
  %697 = vmatmul.mubr.bf16.gmra.mrb[0].mxu0 %v644
  %v698 = vpop.f32.mrb[0].mxu0
  %v699 = vadd.f32 %v592, %v698
  %v700 = vpop.f32.mrb[0].mxu0
  %v701 = vpop.f32.mrb[0].mxu0
  %v702 = vadd.f32 %v597, %v701
  %v703 = vpop.f32.mrb[0].mxu0
  %704 = vmatprep.mubr.bf16.mxu0 0
  %705 = vmatmul.mubr.bf16.gmra.mrb[0].mxu0 %v647
  %v706 = vpop.f32.mrb[0].mxu0
  %v707 = vadd.f32 %v602, %v706
  %v708 = vpop.f32.mrb[0].mxu0
  %v709 = vpop.f32.mrb[0].mxu0
  %v710 = vadd.f32 %v607, %v709
  %v711 = vpop.f32.mrb[0].mxu0
  %712 = vmatprep.mubr.bf16.mxu0 0
  %713 = vmatmul.mubr.bf16.gmra.mrb[0].mxu0 %v650
  %v714 = vpop.f32.mrb[0].mxu0
  %v715 = vadd.f32 %v612, %v714
  %v716 = vpop.f32.mrb[0].mxu0
  %v717 = vpop.f32.mrb[0].mxu0
  %v718 = vadd.f32 %v617, %v717
  %v719 = vpop.f32.mrb[0].mxu0
  %720 = vdwg.mxu0
  %v721 = vmax.f32 %v691, 0.0
  %v722 = vmax.f32 %v694, 0.0
  %v723 = vmax.f32 %v699, 0.0
  %v724 = vmax.f32 %v702, 0.0
  %v725 = vmax.f32 %v707, 0.0
  %v726 = vmax.f32 %v710, 0.0
  %v727 = vmax.f32 %v715, 0.0
  %v728 = vmax.f32 %v718, 0.0
  %v729 = vld [vmem:[%s5] sm:$0xf]
  %v730 = vld [vmem:[%s5 + $0x4] sm:$0xf]
  %v731 = vld [vmem:[%s5 + $0x8] sm:$0xf]
  %v732 = vld [vmem:[%s5 + $0xc] sm:$0xf]
  %v733 = vpack.c.bf16 %v722, %v721
  %v734 = vpack.c.bf16 %v724, %v723
  %v735 = vpack.c.bf16 %v726, %v725
  %v736 = vpack.c.bf16 %v728, %v727
  %v737 = vld [vmem:[%s6] sm:$0xff]
  %v738 = vld [vmem:[%s6 + $0x8] sm:$0xff]
  %v739 = vld [vmem:[%s6 + $0x10] sm:$0xff]
  %v740 = vld [vmem:[%s6 + $0x18] sm:$0xff]
  %742 = vset.pattern.permute.xlu0 0
  %743 = vperm.xlu0 %742, %v737
  %v744 = vpop.permute.xlu0 %743
  %747 = vset.pattern.permute.xlu0 0
  %748 = vperm.xlu0 %747, %v738
  %v749 = vpop.permute.xlu0 %748
  %752 = vset.pattern.permute.xlu0 0
  %753 = vperm.xlu0 %752, %v739
  %v754 = vpop.permute.xlu0 %753
  %757 = vset.pattern.permute.xlu0 0
  %758 = vperm.xlu0 %757, %v740
  %v759 = vpop.permute.xlu0 %758
  %v765 = vunpack.c.l.b16 %v729
  %v766 = vunpack.c.l.b16 %v730
  %v767 = vunpack.c.l.b16 %v731
  %v768 = vunpack.c.l.b16 %v732
  %v769 = vpack.c.b16 %v766, %v765
  %v770 = vpack.c.b16 %v768, %v767
  %vm771 = vcmask 523264
  %v773 = vsel %vm771, %v769, 0
  %v776 = vsel %vm771, %v770, 0
  %778 = vmatprep.subr.bf16.mxu0 0
  %779 = vmatpush1.bf16.msra.mxu0 %v733
  %780 = vmatprep.subr.bf16.mxu0 0
  %781 = vmatpush1.bf16.msra.mxu0 %v734
  %782 = vmatprep.subr.bf16.mxu0 0
  %783 = vmatpush1.bf16.msra.mxu0 %v735
  %784 = vmatprep.subr.bf16.mxu0 0
  %785 = vmatpush1.bf16.msra.mxu0 %v736
  %786 = vmatprep.subr.bf16.mxu0 0
  %787 = vmatpush1.bf16.msra.mxu0 0
  %788 = vmatprep.subr.bf16.mxu0 0
  %789 = vmatpush1.bf16.msra.mxu0 0
  %790 = vmatprep.subr.bf16.mxu0 0
  %791 = vmatpush1.bf16.msra.mxu0 0
  %792 = vmatprep.subr.bf16.mxu0 0
  %793 = vmatpush1.bf16.msra.mxu0 0
  %794 = vmatprep.subr.bf16.mxu0 0
  %795 = vmatpush1.bf16.msra.mxu0 0
  %796 = vmatprep.subr.bf16.mxu0 0
  %797 = vmatpush1.bf16.msra.mxu0 0
  %798 = vmatprep.subr.bf16.mxu0 0
  %799 = vmatpush1.bf16.msra.mxu0 0
  %800 = vmatprep.subr.bf16.mxu0 0
  %801 = vmatpush1.bf16.msra.mxu0 0
  %802 = vmatprep.subr.bf16.mxu0 0
  %803 = vmatpush1.bf16.msra.mxu0 0
  %804 = vmatprep.subr.bf16.mxu0 0
  %805 = vmatpush1.bf16.msra.mxu0 0
  %806 = vmatprep.subr.bf16.mxu0 0
  %807 = vmatpush1.bf16.msra.mxu0 0
  %808 = vmatprep.subr.bf16.mxu0 0
  %809 = vmatpush1.bf16.msra.mxu0 0
  %810 = vmatprep.mubr.bf16.mxu0 0
  %811 = vmatmul.mubr.bf16.gmra.mrb[0].mxu0 %v773
  %v812 = vpop.f32.mrb[0].mxu0
  %v813 = vadd.f32 %v744, %v812
  %v814 = vpop.f32.mrb[0].mxu0
  %v815 = vpop.f32.mrb[0].mxu0
  %v816 = vadd.f32 %v749, %v815
  %v817 = vpop.f32.mrb[0].mxu0
  %818 = vmatprep.mubr.bf16.mxu0 0
  %819 = vmatmul.mubr.bf16.gmra.mrb[0].mxu0 %v776
  %v820 = vpop.f32.mrb[0].mxu0
  %v821 = vadd.f32 %v754, %v820
  %v822 = vpop.f32.mrb[0].mxu0
  %v823 = vpop.f32.mrb[0].mxu0
  %v824 = vadd.f32 %v759, %v823
  %v825 = vpop.f32.mrb[0].mxu0
  %826 = vdwg.mxu0
  %v827 = vmax.f32 %v813, 0.0
  %v828 = vmax.f32 %v816, 0.0
  %v829 = vmax.f32 %v821, 0.0
  %v830 = vmax.f32 %v824, 0.0
  %vm831 = vcmask 64512
  %832 = vst.msk [vmem:[%s7] sm:$0xff] %vm831, %v827
  %833 = vst.msk [vmem:[%s7 + $0x8] sm:$0xff] %vm831, %v828
  %834 = vst.msk [vmem:[%s7 + $0x10] sm:$0xff] %vm831, %v829
  %835 = vst.msk [vmem:[%s7 + $0x18] sm:$0xff] %vm831, %v830
  %s836 = scalar_lea.vmem %s0, 304
  %v837 = vld [vmem:[%s836] sm:$0xff]
  %v838 = vld [vmem:[%s836 + $0x8] sm:$0xff]
  %v839 = vld [vmem:[%s836 + $0x10] sm:$0xff]
  %v840 = vld [vmem:[%s836 + $0x18] sm:$0xff]
  %v841 = vld [vmem:[%s836 + $0x20] sm:$0xff]
  %v842 = vld [vmem:[%s836 + $0x28] sm:$0xff]
  %v843 = vld [vmem:[%s836 + $0x30] sm:$0xff]
  %v844 = vld [vmem:[%s836 + $0x38] sm:$0xff]
  %v845 = vld [vmem:[%s836 + $0x40] sm:$0xff]
  %v846 = vld [vmem:[%s836 + $0x48] sm:$0xff]
  %v847 = vld [vmem:[%s836 + $0x50] sm:$0xff]
  %v848 = vld [vmem:[%s836 + $0x58] sm:$0xff]
  %v849 = vld [vmem:[%s836 + $0x60] sm:$0xff]
  %v850 = vld [vmem:[%s836 + $0x68] sm:$0xff]
  %v851 = vld [vmem:[%s836 + $0x70] sm:$0xff]
  %v852 = vld [vmem:[%s836 + $0x78] sm:$0xff]
  %v853 = vld [vmem:[%s836 + $0x80] sm:$0xff]
  %v854 = vld [vmem:[%s836 + $0x88] sm:$0xff]
  %v855 = vld [vmem:[%s836 + $0x90] sm:$0xff]
  %v856 = vld [vmem:[%s836 + $0x98] sm:$0xff]
  %v857 = vld [vmem:[%s836 + $0xa0] sm:$0xff]
  %v858 = vld [vmem:[%s836 + $0xa8] sm:$0xff]
  %v859 = vld [vmem:[%s836 + $0xb0] sm:$0xff]
  %v860 = vld [vmem:[%s836 + $0xb8] sm:$0xff]
  %v861 = vld [vmem:[%s836 + $0xc0] sm:$0xff]
  %v862 = vld [vmem:[%s836 + $0xc8] sm:$0xff]
  %v863 = vld [vmem:[%s836 + $0xd0] sm:$0xff]
  %v864 = vld [vmem:[%s836 + $0xd8] sm:$0xff]
  %v865 = vld [vmem:[%s836 + $0xe0] sm:$0xff]
  %v866 = vld [vmem:[%s836 + $0xe8] sm:$0xff]
  %v867 = vld [vmem:[%s836 + $0xf0] sm:$0xff]
  %v868 = vld [vmem:[%s836 + $0xf8] sm:$0xff]
  %v869 = vld [vmem:[%s836 + $0x100] sm:$0xff]
  %v870 = vld [vmem:[%s836 + $0x108] sm:$0xff]
  %v871 = vld [vmem:[%s836 + $0x110] sm:$0xff]
  %v872 = vld [vmem:[%s836 + $0x118] sm:$0xff]
  %v873 = vld [vmem:[%s836 + $0x120] sm:$0xff]
  %v874 = vld [vmem:[%s836 + $0x128] sm:$0xf]
  %v875 = vld [vmem:[%s1] sm:$0xff]
  %v876 = vld [vmem:[%s1 + $0x8] sm:$0xf]
  %v877 = vld [vmem:[%s1 + $0xc] sm:$0xff]
  %v878 = vld [vmem:[%s1 + $0x14] sm:$0xf]
  %v879 = vld [vmem:[%s1 + $0x18] sm:$0xff]
  %v880 = vld [vmem:[%s1 + $0x20] sm:$0xf]
  %v881 = vld [vmem:[%s1 + $0x24] sm:$0xff]
  %v882 = vld [vmem:[%s1 + $0x2c] sm:$0xf]
  %v883 = vld [vmem:[%s1 + $0x30] sm:$0xff]
  %v884 = vld [vmem:[%s1 + $0x38] sm:$0xf]
  %v885 = vld [vmem:[%s1 + $0x3c] sm:$0xff]
  %v886 = vld [vmem:[%s1 + $0x44] sm:$0xf]
  %v887 = vld [vmem:[%s1 + $0x48] sm:$0xff]
  %v888 = vld [vmem:[%s1 + $0x50] sm:$0xf]
  %v889 = vld [vmem:[%s1 + $0x54] sm:$0xff]
  %v890 = vld [vmem:[%s1 + $0x5c] sm:$0xf]
  %v891 = vld [vmem:[%s1 + $0x60] sm:$0xff]
  %v892 = vld [vmem:[%s1 + $0x68] sm:$0xf]
  %v893 = vld [vmem:[%s1 + $0x6c] sm:$0xff]
  %v894 = vld [vmem:[%s1 + $0x74] sm:$0xf]
  %v895 = vld [vmem:[%s1 + $0x78] sm:$0xff]
  %v896 = vld [vmem:[%s1 + $0x80] sm:$0xf]
  %v897 = vld [vmem:[%s1 + $0x84] sm:$0xff]
  %v898 = vld [vmem:[%s1 + $0x8c] sm:$0xf]
  %v899 = vld [vmem:[%s1 + $0x90] sm:$0xff]
  %v900 = vld [vmem:[%s1 + $0x98] sm:$0xf]
  %v901 = vld [vmem:[%s1 + $0x9c] sm:$0xff]
  %v902 = vld [vmem:[%s1 + $0xa4] sm:$0xf]
  %v903 = vld [vmem:[%s1 + $0xa8] sm:$0xff]
  %v904 = vld [vmem:[%s1 + $0xb0] sm:$0xf]
  %v905 = vpack.c.bf16 %v838, %v837
  %v906 = vpack.c.bf16 %v840, %v839
  %v907 = vpack.c.bf16 %v842, %v841
  %v908 = vpack.c.bf16 %v844, %v843
  %v909 = vpack.c.bf16 %v846, %v845
  %v910 = vpack.c.bf16 %v848, %v847
  %v911 = vpack.c.bf16 %v850, %v849
  %v912 = vpack.c.bf16 %v852, %v851
  %v913 = vpack.c.bf16 %v854, %v853
  %v914 = vpack.c.bf16 %v856, %v855
  %v915 = vpack.c.bf16 %v858, %v857
  %v916 = vpack.c.bf16 %v860, %v859
  %v917 = vpack.c.bf16 %v862, %v861
  %v918 = vpack.c.bf16 %v864, %v863
  %v919 = vpack.c.bf16 %v866, %v865
  %v920 = vpack.c.bf16 %v868, %v867
  %v921 = vpack.c.bf16 %v870, %v869
  %v922 = vpack.c.bf16 %v872, %v871
  %v923 = vpack.c.bf16 %v874, %v873
  %v924 = vld [vmem:[%s2] sm:$0xff]
  %v925 = vld [vmem:[%s2 + $0x8] sm:$0xff]
  %v926 = vld [vmem:[%s2 + $0x10] sm:$0xff]
  %v927 = vld [vmem:[%s2 + $0x18] sm:$0xff]
  %v928 = vld [vmem:[%s2 + $0x20] sm:$0xff]
  %v929 = vld [vmem:[%s2 + $0x28] sm:$0xff]
  %v930 = vld [vmem:[%s2 + $0x30] sm:$0xff]
  %v931 = vld [vmem:[%s2 + $0x38] sm:$0xff]
  %v932 = vld [vmem:[%s2 + $0x40] sm:$0xff]
  %v933 = vld [vmem:[%s2 + $0x48] sm:$0xff]
  %v934 = vld [vmem:[%s2 + $0x50] sm:$0xff]
  %v935 = vld [vmem:[%s2 + $0x58] sm:$0xff]
  %v936 = vld [vmem:[%s2 + $0x60] sm:$0xff]
  %v937 = vld [vmem:[%s2 + $0x68] sm:$0xff]
  %v938 = vld [vmem:[%s2 + $0x70] sm:$0xff]
  %940 = vset.pattern.permute.xlu0 0
  %941 = vperm.xlu0 %940, %v924
  %v942 = vpop.permute.xlu0 %941
  %945 = vset.pattern.permute.xlu0 0
  %946 = vperm.xlu0 %945, %v925
  %v947 = vpop.permute.xlu0 %946
  %950 = vset.pattern.permute.xlu0 0
  %951 = vperm.xlu0 %950, %v926
  %v952 = vpop.permute.xlu0 %951
  %955 = vset.pattern.permute.xlu0 0
  %956 = vperm.xlu0 %955, %v927
  %v957 = vpop.permute.xlu0 %956
  %960 = vset.pattern.permute.xlu0 0
  %961 = vperm.xlu0 %960, %v928
  %v962 = vpop.permute.xlu0 %961
  %965 = vset.pattern.permute.xlu0 0
  %966 = vperm.xlu0 %965, %v929
  %v967 = vpop.permute.xlu0 %966
  %970 = vset.pattern.permute.xlu0 0
  %971 = vperm.xlu0 %970, %v930
  %v972 = vpop.permute.xlu0 %971
  %975 = vset.pattern.permute.xlu0 0
  %976 = vperm.xlu0 %975, %v931
  %v977 = vpop.permute.xlu0 %976
  %980 = vset.pattern.permute.xlu0 0
  %981 = vperm.xlu0 %980, %v932
  %v982 = vpop.permute.xlu0 %981
  %985 = vset.pattern.permute.xlu0 0
  %986 = vperm.xlu0 %985, %v933
  %v987 = vpop.permute.xlu0 %986
  %990 = vset.pattern.permute.xlu0 0
  %991 = vperm.xlu0 %990, %v934
  %v992 = vpop.permute.xlu0 %991
  %995 = vset.pattern.permute.xlu0 0
  %996 = vperm.xlu0 %995, %v935
  %v997 = vpop.permute.xlu0 %996
  %1000 = vset.pattern.permute.xlu0 0
  %1001 = vperm.xlu0 %1000, %v936
  %v1002 = vpop.permute.xlu0 %1001
  %1005 = vset.pattern.permute.xlu0 0
  %1006 = vperm.xlu0 %1005, %v937
  %v1007 = vpop.permute.xlu0 %1006
  %1010 = vset.pattern.permute.xlu0 0
  %1011 = vperm.xlu0 %1010, %v938
  %v1012 = vpop.permute.xlu0 %1011
  %v1044 = vunpack.c.l.b16 %v875
  %v1045 = vunpack.c.h.b16 %v875
  %v1046 = vunpack.c.l.b16 %v876
  %v1047 = vunpack.c.l.b16 %v877
  %v1048 = vunpack.c.h.b16 %v877
  %v1049 = vunpack.c.l.b16 %v878
  %v1050 = vunpack.c.l.b16 %v879
  %v1051 = vunpack.c.h.b16 %v879
  %v1052 = vunpack.c.l.b16 %v880
  %v1053 = vunpack.c.l.b16 %v881
  %v1054 = vunpack.c.h.b16 %v881
  %v1055 = vunpack.c.l.b16 %v882
  %v1056 = vunpack.c.l.b16 %v883
  %v1057 = vunpack.c.h.b16 %v883
  %v1058 = vunpack.c.l.b16 %v884
  %v1059 = vunpack.c.l.b16 %v885
  %v1060 = vunpack.c.h.b16 %v885
  %v1061 = vunpack.c.l.b16 %v886
  %v1062 = vunpack.c.l.b16 %v887
  %v1063 = vunpack.c.h.b16 %v887
  %v1064 = vunpack.c.l.b16 %v888
  %v1065 = vunpack.c.l.b16 %v889
  %v1066 = vunpack.c.h.b16 %v889
  %v1067 = vunpack.c.l.b16 %v890
  %v1068 = vunpack.c.l.b16 %v891
  %v1069 = vunpack.c.h.b16 %v891
  %v1070 = vunpack.c.l.b16 %v892
  %v1071 = vunpack.c.l.b16 %v893
  %v1072 = vunpack.c.h.b16 %v893
  %v1073 = vunpack.c.l.b16 %v894
  %v1074 = vunpack.c.l.b16 %v895
  %v1075 = vunpack.c.h.b16 %v895
  %v1076 = vunpack.c.l.b16 %v896
  %v1077 = vunpack.c.l.b16 %v897
  %v1078 = vunpack.c.h.b16 %v897
  %v1079 = vunpack.c.l.b16 %v898
  %v1080 = vunpack.c.l.b16 %v899
  %v1081 = vunpack.c.h.b16 %v899
  %v1082 = vunpack.c.l.b16 %v900
  %v1083 = vunpack.c.l.b16 %v901
  %v1084 = vunpack.c.h.b16 %v901
  %v1085 = vunpack.c.l.b16 %v902
  %v1086 = vunpack.c.l.b16 %v903
  %v1087 = vunpack.c.h.b16 %v903
  %v1088 = vunpack.c.l.b16 %v904
  %v1089 = vpack.c.b16 %v1047, %v1044
  %v1090 = vpack.c.b16 %v1048, %v1045
  %v1091 = vpack.c.b16 %v1049, %v1046
  %v1092 = vpack.c.b16 %v1053, %v1050
  %v1093 = vpack.c.b16 %v1054, %v1051
  %v1094 = vpack.c.b16 %v1055, %v1052
  %v1095 = vpack.c.b16 %v1059, %v1056
  %v1096 = vpack.c.b16 %v1060, %v1057
  %v1097 = vpack.c.b16 %v1061, %v1058
  %v1098 = vpack.c.b16 %v1065, %v1062
  %v1099 = vpack.c.b16 %v1066, %v1063
  %v1100 = vpack.c.b16 %v1067, %v1064
  %v1101 = vpack.c.b16 %v1071, %v1068
  %v1102 = vpack.c.b16 %v1072, %v1069
  %v1103 = vpack.c.b16 %v1073, %v1070
  %v1104 = vpack.c.b16 %v1077, %v1074
  %v1105 = vpack.c.b16 %v1078, %v1075
  %v1106 = vpack.c.b16 %v1079, %v1076
  %v1107 = vpack.c.b16 %v1083, %v1080
  %v1108 = vpack.c.b16 %v1084, %v1081
  %v1109 = vpack.c.b16 %v1085, %v1082
  %v1110 = vpack.c.b16 %v1086, %v1086
  %v1111 = vpack.c.b16 %v1087, %v1087
  %v1112 = vpack.c.b16 %v1088, %v1088
  %v1130 = vsel %vm319, %v1091, 0
  %v1133 = vsel %vm319, %v1094, 0
  %v1136 = vsel %vm319, %v1097, 0
  %v1139 = vsel %vm319, %v1100, 0
  %v1142 = vsel %vm319, %v1103, 0
  %v1145 = vsel %vm319, %v1106, 0
  %v1148 = vsel %vm319, %v1109, 0
  %v1151 = vsel %vm319, %v1112, 0
  %v1154 = vsel %vm344, %v923, 0
  %1156 = vmatprep.subr.bf16.mxu0 0
  %1157 = vmatpush1.bf16.msra.mxu0 %v905
  %1158 = vmatprep.subr.bf16.mxu0 0
  %1159 = vmatpush1.bf16.msra.mxu0 %v906
  %1160 = vmatprep.subr.bf16.mxu0 0
  %1161 = vmatpush1.bf16.msra.mxu0 %v907
  %1162 = vmatprep.subr.bf16.mxu0 0
  %1163 = vmatpush1.bf16.msra.mxu0 %v908
  %1164 = vmatprep.subr.bf16.mxu0 0
  %1165 = vmatpush1.bf16.msra.mxu0 %v909
  %1166 = vmatprep.subr.bf16.mxu0 0
  %1167 = vmatpush1.bf16.msra.mxu0 %v910
  %1168 = vmatprep.subr.bf16.mxu0 0
  %1169 = vmatpush1.bf16.msra.mxu0 %v911
  %1170 = vmatprep.subr.bf16.mxu0 0
  %1171 = vmatpush1.bf16.msra.mxu0 %v912
  %1172 = vmatprep.subr.bf16.mxu0 0
  %1173 = vmatpush1.bf16.msra.mxu0 %v913
  %1174 = vmatprep.subr.bf16.mxu0 0
  %1175 = vmatpush1.bf16.msra.mxu0 %v914
  %1176 = vmatprep.subr.bf16.mxu0 0
  %1177 = vmatpush1.bf16.msra.mxu0 %v915
  %1178 = vmatprep.subr.bf16.mxu0 0
  %1179 = vmatpush1.bf16.msra.mxu0 %v916
  %1180 = vmatprep.subr.bf16.mxu0 0
  %1181 = vmatpush1.bf16.msra.mxu0 %v917
  %1182 = vmatprep.subr.bf16.mxu0 0
  %1183 = vmatpush1.bf16.msra.mxu0 %v918
  %1184 = vmatprep.subr.bf16.mxu0 0
  %1185 = vmatpush1.bf16.msra.mxu0 %v919
  %1186 = vmatprep.subr.bf16.mxu0 0
  %1187 = vmatpush1.bf16.msra.mxu0 %v920
  %1188 = vmatprep.mubr.bf16.mxu0 %v1090
  %1189 = vmatmul.mubr.bf16.gmra.mrb[0].mxu0 %v1089
  %v1190 = vpop.f32.mrb[0].mxu0
  %v1191 = vadd.f32 %v942, %v1190
  %v1192 = vpop.f32.mrb[0].mxu0
  %v1193 = vpop.f32.mrb[0].mxu0
  %v1194 = vadd.f32 %v947, %v1193
  %v1195 = vpop.f32.mrb[0].mxu0
  %1196 = vmatprep.mubr.bf16.mxu0 %v1093
  %1197 = vmatmul.mubr.bf16.gmra.mrb[0].mxu0 %v1092
  %v1198 = vpop.f32.mrb[0].mxu0
  %v1199 = vadd.f32 %v952, %v1198
  %v1200 = vpop.f32.mrb[0].mxu0
  %v1201 = vpop.f32.mrb[0].mxu0
  %v1202 = vadd.f32 %v957, %v1201
  %v1203 = vpop.f32.mrb[0].mxu0
  %1204 = vmatprep.mubr.bf16.mxu0 %v1096
  %1205 = vmatmul.mubr.bf16.gmra.mrb[0].mxu0 %v1095
  %v1206 = vpop.f32.mrb[0].mxu0
  %v1207 = vadd.f32 %v962, %v1206
  %v1208 = vpop.f32.mrb[0].mxu0
  %v1209 = vpop.f32.mrb[0].mxu0
  %v1210 = vadd.f32 %v967, %v1209
  %v1211 = vpop.f32.mrb[0].mxu0
  %1212 = vmatprep.mubr.bf16.mxu0 %v1099
  %1213 = vmatmul.mubr.bf16.gmra.mrb[0].mxu0 %v1098
  %v1214 = vpop.f32.mrb[0].mxu0
  %v1215 = vadd.f32 %v972, %v1214
  %v1216 = vpop.f32.mrb[0].mxu0
  %v1217 = vpop.f32.mrb[0].mxu0
  %v1218 = vadd.f32 %v977, %v1217
  %v1219 = vpop.f32.mrb[0].mxu0
  %1220 = vmatprep.mubr.bf16.mxu0 %v1102
  %1221 = vmatmul.mubr.bf16.gmra.mrb[0].mxu0 %v1101
  %v1222 = vpop.f32.mrb[0].mxu0
  %v1223 = vadd.f32 %v982, %v1222
  %v1224 = vpop.f32.mrb[0].mxu0
  %v1225 = vpop.f32.mrb[0].mxu0
  %v1226 = vadd.f32 %v987, %v1225
  %v1227 = vpop.f32.mrb[0].mxu0
  %1228 = vmatprep.mubr.bf16.mxu0 %v1105
  %1229 = vmatmul.mubr.bf16.gmra.mrb[0].mxu0 %v1104
  %v1230 = vpop.f32.mrb[0].mxu0
  %v1231 = vadd.f32 %v992, %v1230
  %v1232 = vpop.f32.mrb[0].mxu0
  %v1233 = vpop.f32.mrb[0].mxu0
  %v1234 = vadd.f32 %v997, %v1233
  %v1235 = vpop.f32.mrb[0].mxu0
  %1236 = vmatprep.mubr.bf16.mxu0 %v1108
  %1237 = vmatmul.mubr.bf16.gmra.mrb[0].mxu0 %v1107
  %v1238 = vpop.f32.mrb[0].mxu0
  %v1239 = vadd.f32 %v1002, %v1238
  %v1240 = vpop.f32.mrb[0].mxu0
  %v1241 = vpop.f32.mrb[0].mxu0
  %v1242 = vadd.f32 %v1007, %v1241
  %v1243 = vpop.f32.mrb[0].mxu0
  %1244 = vmatprep.mubr.bf16.mxu0 %v1111
  %1245 = vmatmul.mubr.bf16.gmra.mrb[0].mxu0 %v1110
  %v1246 = vpop.f32.mrb[0].mxu0
  %v1247 = vadd.f32 %v1012, %v1246
  %v1248 = vpop.f32.mrb[0].mxu0
  %v1249 = vpop.f32.mrb[0].mxu0
  %v1250 = vpop.f32.mrb[0].mxu0
  %1251 = vdwg.mxu0
  %1252 = vmatprep.subr.bf16.mxu0 0
  %1253 = vmatpush1.bf16.msra.mxu0 %v921
  %1254 = vmatprep.subr.bf16.mxu0 0
  %1255 = vmatpush1.bf16.msra.mxu0 %v922
  %1256 = vmatprep.subr.bf16.mxu0 0
  %1257 = vmatpush1.bf16.msra.mxu0 %v1154
  %1258 = vmatprep.subr.bf16.mxu0 0
  %1259 = vmatpush1.bf16.msra.mxu0 0
  %1260 = vmatprep.subr.bf16.mxu0 0
  %1261 = vmatpush1.bf16.msra.mxu0 0
  %1262 = vmatprep.subr.bf16.mxu0 0
  %1263 = vmatpush1.bf16.msra.mxu0 0
  %1264 = vmatprep.subr.bf16.mxu0 0
  %1265 = vmatpush1.bf16.msra.mxu0 0
  %1266 = vmatprep.subr.bf16.mxu0 0
  %1267 = vmatpush1.bf16.msra.mxu0 0
  %1268 = vmatprep.subr.bf16.mxu0 0
  %1269 = vmatpush1.bf16.msra.mxu0 0
  %1270 = vmatprep.subr.bf16.mxu0 0
  %1271 = vmatpush1.bf16.msra.mxu0 0
  %1272 = vmatprep.subr.bf16.mxu0 0
  %1273 = vmatpush1.bf16.msra.mxu0 0
  %1274 = vmatprep.subr.bf16.mxu0 0
  %1275 = vmatpush1.bf16.msra.mxu0 0
  %1276 = vmatprep.subr.bf16.mxu0 0
  %1277 = vmatpush1.bf16.msra.mxu0 0
  %1278 = vmatprep.subr.bf16.mxu0 0
  %1279 = vmatpush1.bf16.msra.mxu0 0
  %1280 = vmatprep.subr.bf16.mxu0 0
  %1281 = vmatpush1.bf16.msra.mxu0 0
  %1282 = vmatprep.subr.bf16.mxu0 0
  %1283 = vmatpush1.bf16.msra.mxu0 0
  %1284 = vmatprep.mubr.bf16.mxu0 0
  %1285 = vmatmul.mubr.bf16.gmra.mrb[0].mxu0 %v1130
  %v1286 = vpop.f32.mrb[0].mxu0
  %v1287 = vadd.f32 %v1191, %v1286
  %v1288 = vpop.f32.mrb[0].mxu0
  %v1289 = vpop.f32.mrb[0].mxu0
  %v1290 = vadd.f32 %v1194, %v1289
  %v1291 = vpop.f32.mrb[0].mxu0
  %1292 = vmatprep.mubr.bf16.mxu0 0
  %1293 = vmatmul.mubr.bf16.gmra.mrb[0].mxu0 %v1133
  %v1294 = vpop.f32.mrb[0].mxu0
  %v1295 = vadd.f32 %v1199, %v1294
  %v1296 = vpop.f32.mrb[0].mxu0
  %v1297 = vpop.f32.mrb[0].mxu0
  %v1298 = vadd.f32 %v1202, %v1297
  %v1299 = vpop.f32.mrb[0].mxu0
  %1300 = vmatprep.mubr.bf16.mxu0 0
  %1301 = vmatmul.mubr.bf16.gmra.mrb[0].mxu0 %v1136
  %v1302 = vpop.f32.mrb[0].mxu0
  %v1303 = vadd.f32 %v1207, %v1302
  %v1304 = vpop.f32.mrb[0].mxu0
  %v1305 = vpop.f32.mrb[0].mxu0
  %v1306 = vadd.f32 %v1210, %v1305
  %v1307 = vpop.f32.mrb[0].mxu0
  %1308 = vmatprep.mubr.bf16.mxu0 0
  %1309 = vmatmul.mubr.bf16.gmra.mrb[0].mxu0 %v1139
  %v1310 = vpop.f32.mrb[0].mxu0
  %v1311 = vadd.f32 %v1215, %v1310
  %v1312 = vpop.f32.mrb[0].mxu0
  %v1313 = vpop.f32.mrb[0].mxu0
  %v1314 = vadd.f32 %v1218, %v1313
  %v1315 = vpop.f32.mrb[0].mxu0
  %1316 = vmatprep.mubr.bf16.mxu0 0
  %1317 = vmatmul.mubr.bf16.gmra.mrb[0].mxu0 %v1142
  %v1318 = vpop.f32.mrb[0].mxu0
  %v1319 = vadd.f32 %v1223, %v1318
  %v1320 = vpop.f32.mrb[0].mxu0
  %v1321 = vpop.f32.mrb[0].mxu0
  %v1322 = vadd.f32 %v1226, %v1321
  %v1323 = vpop.f32.mrb[0].mxu0
  %1324 = vmatprep.mubr.bf16.mxu0 0
  %1325 = vmatmul.mubr.bf16.gmra.mrb[0].mxu0 %v1145
  %v1326 = vpop.f32.mrb[0].mxu0
  %v1327 = vadd.f32 %v1231, %v1326
  %v1328 = vpop.f32.mrb[0].mxu0
  %v1329 = vpop.f32.mrb[0].mxu0
  %v1330 = vadd.f32 %v1234, %v1329
  %v1331 = vpop.f32.mrb[0].mxu0
  %1332 = vmatprep.mubr.bf16.mxu0 0
  %1333 = vmatmul.mubr.bf16.gmra.mrb[0].mxu0 %v1148
  %v1334 = vpop.f32.mrb[0].mxu0
  %v1335 = vadd.f32 %v1239, %v1334
  %v1336 = vpop.f32.mrb[0].mxu0
  %v1337 = vpop.f32.mrb[0].mxu0
  %v1338 = vadd.f32 %v1242, %v1337
  %v1339 = vpop.f32.mrb[0].mxu0
  %1340 = vmatprep.mubr.bf16.mxu0 0
  %1341 = vmatmul.mubr.bf16.gmra.mrb[0].mxu0 %v1151
  %v1342 = vpop.f32.mrb[0].mxu0
  %v1343 = vadd.f32 %v1247, %v1342
  %v1344 = vpop.f32.mrb[0].mxu0
  %v1345 = vpop.f32.mrb[0].mxu0
  %v1346 = vpop.f32.mrb[0].mxu0
  %1347 = vdwg.mxu0
  %v1348 = vmax.f32 %v1287, 0.0
  %v1349 = vmax.f32 %v1290, 0.0
  %v1350 = vmax.f32 %v1295, 0.0
  %v1351 = vmax.f32 %v1298, 0.0
  %v1352 = vmax.f32 %v1303, 0.0
  %v1353 = vmax.f32 %v1306, 0.0
  %v1354 = vmax.f32 %v1311, 0.0
  %v1355 = vmax.f32 %v1314, 0.0
  %v1356 = vmax.f32 %v1319, 0.0
  %v1357 = vmax.f32 %v1322, 0.0
  %v1358 = vmax.f32 %v1327, 0.0
  %v1359 = vmax.f32 %v1330, 0.0
  %v1360 = vmax.f32 %v1335, 0.0
  %v1361 = vmax.f32 %v1338, 0.0
  %v1362 = vmax.f32 %v1343, 0.0
  %v1363 = vld [vmem:[%s3] sm:$0xf]
  %v1364 = vld [vmem:[%s3 + $0x4] sm:$0xf]
  %v1365 = vld [vmem:[%s3 + $0x8] sm:$0xf]
  %v1366 = vld [vmem:[%s3 + $0xc] sm:$0xf]
  %v1367 = vld [vmem:[%s3 + $0x10] sm:$0xf]
  %v1368 = vld [vmem:[%s3 + $0x14] sm:$0xf]
  %v1369 = vld [vmem:[%s3 + $0x18] sm:$0xf]
  %v1370 = vld [vmem:[%s3 + $0x1c] sm:$0xf]
  %v1371 = vpack.c.bf16 %v1349, %v1348
  %v1372 = vpack.c.bf16 %v1351, %v1350
  %v1373 = vpack.c.bf16 %v1353, %v1352
  %v1374 = vpack.c.bf16 %v1355, %v1354
  %v1375 = vpack.c.bf16 %v1357, %v1356
  %v1376 = vpack.c.bf16 %v1359, %v1358
  %v1377 = vpack.c.bf16 %v1361, %v1360
  %v1378 = vpack.c.bf16 %v1362, %v1362
  %v1379 = vld [vmem:[%s4] sm:$0xff]
  %v1380 = vld [vmem:[%s4 + $0x8] sm:$0xff]
  %v1381 = vld [vmem:[%s4 + $0x10] sm:$0xff]
  %v1382 = vld [vmem:[%s4 + $0x18] sm:$0xff]
  %v1383 = vld [vmem:[%s4 + $0x20] sm:$0xff]
  %v1384 = vld [vmem:[%s4 + $0x28] sm:$0xff]
  %v1385 = vld [vmem:[%s4 + $0x30] sm:$0xff]
  %v1386 = vld [vmem:[%s4 + $0x38] sm:$0xff]
  %1388 = vset.pattern.permute.xlu0 0
  %1389 = vperm.xlu0 %1388, %v1379
  %v1390 = vpop.permute.xlu0 %1389
  %1393 = vset.pattern.permute.xlu0 0
  %1394 = vperm.xlu0 %1393, %v1380
  %v1395 = vpop.permute.xlu0 %1394
  %1398 = vset.pattern.permute.xlu0 0
  %1399 = vperm.xlu0 %1398, %v1381
  %v1400 = vpop.permute.xlu0 %1399
  %1403 = vset.pattern.permute.xlu0 0
  %1404 = vperm.xlu0 %1403, %v1382
  %v1405 = vpop.permute.xlu0 %1404
  %1408 = vset.pattern.permute.xlu0 0
  %1409 = vperm.xlu0 %1408, %v1383
  %v1410 = vpop.permute.xlu0 %1409
  %1413 = vset.pattern.permute.xlu0 0
  %1414 = vperm.xlu0 %1413, %v1384
  %v1415 = vpop.permute.xlu0 %1414
  %1418 = vset.pattern.permute.xlu0 0
  %1419 = vperm.xlu0 %1418, %v1385
  %v1420 = vpop.permute.xlu0 %1419
  %1423 = vset.pattern.permute.xlu0 0
  %1424 = vperm.xlu0 %1423, %v1386
  %v1425 = vpop.permute.xlu0 %1424
  %v1435 = vunpack.c.l.b16 %v1363
  %v1436 = vunpack.c.l.b16 %v1364
  %v1437 = vunpack.c.l.b16 %v1365
  %v1438 = vunpack.c.l.b16 %v1366
  %v1439 = vunpack.c.l.b16 %v1367
  %v1440 = vunpack.c.l.b16 %v1368
  %v1441 = vunpack.c.l.b16 %v1369
  %v1442 = vunpack.c.l.b16 %v1370
  %v1443 = vpack.c.b16 %v1436, %v1435
  %v1444 = vpack.c.b16 %v1438, %v1437
  %v1445 = vpack.c.b16 %v1440, %v1439
  %v1446 = vpack.c.b16 %v1442, %v1441
  %v1448 = vsel %vm639, %v1443, 0
  %v1451 = vsel %vm639, %v1444, 0
  %v1454 = vsel %vm639, %v1445, 0
  %v1457 = vsel %vm639, %v1446, 0
  %v1460 = vsel %vm652, %v1378, 0
  %1462 = vmatprep.subr.bf16.mxu0 0
  %1463 = vmatpush1.bf16.msra.mxu0 %v1371
  %1464 = vmatprep.subr.bf16.mxu0 0
  %1465 = vmatpush1.bf16.msra.mxu0 %v1372
  %1466 = vmatprep.subr.bf16.mxu0 0
  %1467 = vmatpush1.bf16.msra.mxu0 %v1373
  %1468 = vmatprep.subr.bf16.mxu0 0
  %1469 = vmatpush1.bf16.msra.mxu0 %v1374
  %1470 = vmatprep.subr.bf16.mxu0 0
  %1471 = vmatpush1.bf16.msra.mxu0 %v1375
  %1472 = vmatprep.subr.bf16.mxu0 0
  %1473 = vmatpush1.bf16.msra.mxu0 %v1376
  %1474 = vmatprep.subr.bf16.mxu0 0
  %1475 = vmatpush1.bf16.msra.mxu0 %v1377
  %1476 = vmatprep.subr.bf16.mxu0 0
  %1477 = vmatpush1.bf16.msra.mxu0 %v1460
  %1478 = vmatprep.subr.bf16.mxu0 0
  %1479 = vmatpush1.bf16.msra.mxu0 0
  %1480 = vmatprep.subr.bf16.mxu0 0
  %1481 = vmatpush1.bf16.msra.mxu0 0
  %1482 = vmatprep.subr.bf16.mxu0 0
  %1483 = vmatpush1.bf16.msra.mxu0 0
  %1484 = vmatprep.subr.bf16.mxu0 0
  %1485 = vmatpush1.bf16.msra.mxu0 0
  %1486 = vmatprep.subr.bf16.mxu0 0
  %1487 = vmatpush1.bf16.msra.mxu0 0
  %1488 = vmatprep.subr.bf16.mxu0 0
  %1489 = vmatpush1.bf16.msra.mxu0 0
  %1490 = vmatprep.subr.bf16.mxu0 0
  %1491 = vmatpush1.bf16.msra.mxu0 0
  %1492 = vmatprep.subr.bf16.mxu0 0
  %1493 = vmatpush1.bf16.msra.mxu0 0
  %1494 = vmatprep.mubr.bf16.mxu0 0
  %1495 = vmatmul.mubr.bf16.gmra.mrb[0].mxu0 %v1448
  %v1496 = vpop.f32.mrb[0].mxu0
  %v1497 = vadd.f32 %v1390, %v1496
  %v1498 = vpop.f32.mrb[0].mxu0
  %v1499 = vpop.f32.mrb[0].mxu0
  %v1500 = vadd.f32 %v1395, %v1499
  %v1501 = vpop.f32.mrb[0].mxu0
  %1502 = vmatprep.mubr.bf16.mxu0 0
  %1503 = vmatmul.mubr.bf16.gmra.mrb[0].mxu0 %v1451
  %v1504 = vpop.f32.mrb[0].mxu0
  %v1505 = vadd.f32 %v1400, %v1504
  %v1506 = vpop.f32.mrb[0].mxu0
  %v1507 = vpop.f32.mrb[0].mxu0
  %v1508 = vadd.f32 %v1405, %v1507
  %v1509 = vpop.f32.mrb[0].mxu0
  %1510 = vmatprep.mubr.bf16.mxu0 0
  %1511 = vmatmul.mubr.bf16.gmra.mrb[0].mxu0 %v1454
  %v1512 = vpop.f32.mrb[0].mxu0
  %v1513 = vadd.f32 %v1410, %v1512
  %v1514 = vpop.f32.mrb[0].mxu0
  %v1515 = vpop.f32.mrb[0].mxu0
  %v1516 = vadd.f32 %v1415, %v1515
  %v1517 = vpop.f32.mrb[0].mxu0
  %1518 = vmatprep.mubr.bf16.mxu0 0
  %1519 = vmatmul.mubr.bf16.gmra.mrb[0].mxu0 %v1457
  %v1520 = vpop.f32.mrb[0].mxu0
  %v1521 = vadd.f32 %v1420, %v1520
  %v1522 = vpop.f32.mrb[0].mxu0
  %v1523 = vpop.f32.mrb[0].mxu0
  %v1524 = vadd.f32 %v1425, %v1523
  %v1525 = vpop.f32.mrb[0].mxu0
  %1526 = vdwg.mxu0
  %v1527 = vmax.f32 %v1497, 0.0
  %v1528 = vmax.f32 %v1500, 0.0
  %v1529 = vmax.f32 %v1505, 0.0
  %v1530 = vmax.f32 %v1508, 0.0
  %v1531 = vmax.f32 %v1513, 0.0
  %v1532 = vmax.f32 %v1516, 0.0
  %v1533 = vmax.f32 %v1521, 0.0
  %v1534 = vmax.f32 %v1524, 0.0
  %v1535 = vld [vmem:[%s5] sm:$0xf]
  %v1536 = vld [vmem:[%s5 + $0x4] sm:$0xf]
  %v1537 = vld [vmem:[%s5 + $0x8] sm:$0xf]
  %v1538 = vld [vmem:[%s5 + $0xc] sm:$0xf]
  %v1539 = vpack.c.bf16 %v1528, %v1527
  %v1540 = vpack.c.bf16 %v1530, %v1529
  %v1541 = vpack.c.bf16 %v1532, %v1531
  %v1542 = vpack.c.bf16 %v1534, %v1533
  %v1543 = vld [vmem:[%s6] sm:$0xff]
  %v1544 = vld [vmem:[%s6 + $0x8] sm:$0xff]
  %v1545 = vld [vmem:[%s6 + $0x10] sm:$0xff]
  %v1546 = vld [vmem:[%s6 + $0x18] sm:$0xff]
  %1548 = vset.pattern.permute.xlu0 0
  %1549 = vperm.xlu0 %1548, %v1543
  %v1550 = vpop.permute.xlu0 %1549
  %1553 = vset.pattern.permute.xlu0 0
  %1554 = vperm.xlu0 %1553, %v1544
  %v1555 = vpop.permute.xlu0 %1554
  %1558 = vset.pattern.permute.xlu0 0
  %1559 = vperm.xlu0 %1558, %v1545
  %v1560 = vpop.permute.xlu0 %1559
  %1563 = vset.pattern.permute.xlu0 0
  %1564 = vperm.xlu0 %1563, %v1546
  %v1565 = vpop.permute.xlu0 %1564
  %v1571 = vunpack.c.l.b16 %v1535
  %v1572 = vunpack.c.l.b16 %v1536
  %v1573 = vunpack.c.l.b16 %v1537
  %v1574 = vunpack.c.l.b16 %v1538
  %v1575 = vpack.c.b16 %v1572, %v1571
  %v1576 = vpack.c.b16 %v1574, %v1573
  %v1578 = vsel %vm771, %v1575, 0
  %v1581 = vsel %vm771, %v1576, 0
  %1583 = vmatprep.subr.bf16.mxu0 0
  %1584 = vmatpush1.bf16.msra.mxu0 %v1539
  %1585 = vmatprep.subr.bf16.mxu0 0
  %1586 = vmatpush1.bf16.msra.mxu0 %v1540
  %1587 = vmatprep.subr.bf16.mxu0 0
  %1588 = vmatpush1.bf16.msra.mxu0 %v1541
  %1589 = vmatprep.subr.bf16.mxu0 0
  %1590 = vmatpush1.bf16.msra.mxu0 %v1542
  %1591 = vmatprep.subr.bf16.mxu0 0
  %1592 = vmatpush1.bf16.msra.mxu0 0
  %1593 = vmatprep.subr.bf16.mxu0 0
  %1594 = vmatpush1.bf16.msra.mxu0 0
  %1595 = vmatprep.subr.bf16.mxu0 0
  %1596 = vmatpush1.bf16.msra.mxu0 0
  %1597 = vmatprep.subr.bf16.mxu0 0
  %1598 = vmatpush1.bf16.msra.mxu0 0
  %1599 = vmatprep.subr.bf16.mxu0 0
  %1600 = vmatpush1.bf16.msra.mxu0 0
  %1601 = vmatprep.subr.bf16.mxu0 0
  %1602 = vmatpush1.bf16.msra.mxu0 0
  %1603 = vmatprep.subr.bf16.mxu0 0
  %1604 = vmatpush1.bf16.msra.mxu0 0
  %1605 = vmatprep.subr.bf16.mxu0 0
  %1606 = vmatpush1.bf16.msra.mxu0 0
  %1607 = vmatprep.subr.bf16.mxu0 0
  %1608 = vmatpush1.bf16.msra.mxu0 0
  %1609 = vmatprep.subr.bf16.mxu0 0
  %1610 = vmatpush1.bf16.msra.mxu0 0
  %1611 = vmatprep.subr.bf16.mxu0 0
  %1612 = vmatpush1.bf16.msra.mxu0 0
  %1613 = vmatprep.subr.bf16.mxu0 0
  %1614 = vmatpush1.bf16.msra.mxu0 0
  %1615 = vmatprep.mubr.bf16.mxu0 0
  %1616 = vmatmul.mubr.bf16.gmra.mrb[0].mxu0 %v1578
  %v1617 = vpop.f32.mrb[0].mxu0
  %v1618 = vadd.f32 %v1550, %v1617
  %v1619 = vpop.f32.mrb[0].mxu0
  %v1620 = vpop.f32.mrb[0].mxu0
  %v1621 = vadd.f32 %v1555, %v1620
  %v1622 = vpop.f32.mrb[0].mxu0
  %1623 = vmatprep.mubr.bf16.mxu0 0
  %1624 = vmatmul.mubr.bf16.gmra.mrb[0].mxu0 %v1581
  %v1625 = vpop.f32.mrb[0].mxu0
  %v1626 = vadd.f32 %v1560, %v1625
  %v1627 = vpop.f32.mrb[0].mxu0
  %v1628 = vpop.f32.mrb[0].mxu0
  %v1629 = vadd.f32 %v1565, %v1628
  %v1630 = vpop.f32.mrb[0].mxu0
  %1631 = vdwg.mxu0
  %v1632 = vmax.f32 %v1618, 0.0
  %v1633 = vmax.f32 %v1621, 0.0
  %v1634 = vmax.f32 %v1626, 0.0
  %v1635 = vmax.f32 %v1629, 0.0
  %s1636 = scalar_lea.vmem %s7, 32
  %1637 = vst.msk [vmem:[%s1636] sm:$0xff] %vm831, %v1632
  %1638 = vst.msk [vmem:[%s1636 + $0x8] sm:$0xff] %vm831, %v1633
  %1639 = vst.msk [vmem:[%s1636 + $0x10] sm:$0xff] %vm831, %v1634
  %1640 = vst.msk [vmem:[%s1636 + $0x18] sm:$0xff] %vm831, %v1635
  // Predicated region
  $region30: #{textnw_forward.1} parent=0 // pred_check
    _
  $region31: #{textnw_forward.1} parent=0 // pred_check_branch
    %1642 = sbr.rel (0) target = $region33
  $region32: #{textnw_forward.1} parent=0 // pred_region
    _
  $region33: #{textnw_forward.1} parent=0 // pred_fallthru
    _
  // Predicated region
  $region34: #{textnw_forward.1} parent=0 // pred_check
    _
  $region35: #{textnw_forward.1} parent=0 // pred_check_branch
    %1644 = sbr.rel (0) target = $region37
  $region36: #{textnw_forward.1} parent=0 // pred_region
    _
  $region37: #{textnw_forward.1} parent=0 // pred_fallthru
    _

</llo_original>
